<compile_context>
chip_gen: v7x
topology: tpu7x:2x2x1
jax: 0.10.0
libtpu: 0.0.40
codegen_flags: <defaults>
</compile_context>

<pallas_src>
import functools

import jax
import jax.numpy as jnp
from jax.experimental import pallas as pl
from jax.experimental.pallas import tpu as pltpu

EPS = 1e-5


# --------------------------------------------------------------------------- #
# In-kernel depthwise 3x3 conv (pad=1) on a channels-last block.
# --------------------------------------------------------------------------- #
def _dw_conv3x3(x, wt):
    """x: (n, h, w, cb) channels-last block; wt: (9, cb) taps (row = ki*3+kj),
    same dtype as x. Returns f32 (n, h, w, cb) conv output (no bias)."""
    n, h, w, cb = x.shape
    # Single H-pad copy shared by all 9 taps (was one H-pad per column tap).
    zrow = jnp.zeros((n, 1, w, cb), x.dtype)
    xh = jnp.concatenate([zrow, x, zrow], axis=1)                # (n, h+2, w, cb)
    zcol = jnp.zeros((n, h + 2, 1, cb), x.dtype)

    acc = jnp.zeros((n, h, w, cb), jnp.float32)
    for kj in range(3):
        # One W-shifted copy per column tap, reused by its 3 row taps.
        # (pltpu.roll + a hoisted boundary mask would move this copy onto the idle
        #  XLU slot; kept as concatenate for lowering robustness.)
        if kj == 0:
            xs = jnp.concatenate([zcol, xh[:, :, : w - 1, :]], axis=2)
        elif kj == 1:
            xs = xh
        else:
            xs = jnp.concatenate([xh[:, :, 1:, :], zcol], axis=2)

        if x.dtype == jnp.bfloat16:
            # bf16 fast path (v6e/v7x): multiply + sum the 3 row taps in packed bf16,
            # single upcast into the f32 accumulator per column tap.
            part = jnp.zeros((n, h, w, cb), jnp.bfloat16)
            for ki in range(3):
                r = ki * 3 + kj
                tap = wt[r:r + 1, :].reshape(1, 1, 1, cb)
                part = part + xs[:, ki:ki + h, :, :] * tap
            acc = acc + part.astype(jnp.float32)
        else:
            for ki in range(3):
                r = ki * 3 + kj
                tap = wt[r:r + 1, :].reshape(1, 1, 1, cb)
                acc = acc + (xs[:, ki:ki + h, :, :] * tap).astype(jnp.float32)
    return acc


# --------------------------------------------------------------------------- #
# Kernels
# --------------------------------------------------------------------------- #
def _dwconv_bn_fused_kernel(x_ref, w_ref, g_ref, b_ref, o_ref):
    # Fused path: the block carries the full (N, H, W) extent of its channels,
    # so training-mode BN stats are exact per block. Channels sit on the lane
    # axis -> reductions never cross lanes, stores are lane-dense.
    n, h, w, cb = x_ref.shape
    x = x_ref[...]
    wt = w_ref[...].astype(x.dtype)
    acc = _dw_conv3x3(x, wt)                                     # f32

    count = jnp.float32(n * h * w)
    mean = jnp.sum(acc, axis=(0, 1, 2), keepdims=True) / count   # (1,1,1,cb)
    # Two-pass (centered) variance: better numerics, no acc*acc block temporary.
    var = jnp.sum(jnp.square(acc - mean), axis=(0, 1, 2), keepdims=True) / count

    gamma = g_ref[...].astype(jnp.float32).reshape(1, 1, 1, cb)
    beta = b_ref[...].astype(jnp.float32).reshape(1, 1, 1, cb)
    a_c = gamma * jax.lax.rsqrt(var + EPS)                        # rsqrt -> EUP slot
    b_c = beta - mean * a_c
    o_ref[...] = (acc * a_c + b_c).astype(o_ref.dtype)            # one mul+add / elem


def _dwconv_stats_kernel(x_ref, w_ref, y_ref, s1_ref, s2_ref, s1_acc, s2_acc):
    # Pass 1 of the batch-tiled path: depthwise conv for this (batch, channel)
    # block + per-channel partial sums accumulated across the batch grid axis.
    cb = x_ref.shape[-1]
    x = x_ref[...]
    wt = w_ref[...].astype(x.dtype)
    acc = _dw_conv3x3(x, wt)
    y_ref[...] = acc                                              # f32 intermediate

    ps1 = jnp.sum(acc, axis=(0, 1, 2), keepdims=True).reshape(1, cb)
    ps2 = jnp.sum(jnp.square(acc), axis=(0, 1, 2), keepdims=True).reshape(1, cb)

    @pl.when(pl.program_id(1) == 0)
    def _():
        s1_acc[...] = jnp.zeros_like(s1_acc)
        s2_acc[...] = jnp.zeros_like(s2_acc)

    s1_acc[...] += ps1
    s2_acc[...] += ps2
    # Output block index is constant across the batch ("arbitrary") axis, so the
    # buffer stays resident; the value flushed to HBM is the last-step full sum.
    s1_ref[...] = s1_acc[...]
    s2_ref[...] = s2_acc[...]


def _bn_apply_kernel(y_ref, s1_ref, s2_ref, g_ref, b_ref, o_ref, *, count):
    # Pass 2: per-channel scale+shift applied while streaming y once.
    cb = y_ref.shape[-1]
    mean = (s1_ref[...] / count).reshape(1, 1, 1, cb)
    var = jnp.maximum(s2_ref[...].reshape(1, 1, 1, cb) / count - mean * mean, 0.0)
    gamma = g_ref[...].astype(jnp.float32).reshape(1, 1, 1, cb)
    beta = b_ref[...].astype(jnp.float32).reshape(1, 1, 1, cb)
    a_c = gamma * jax.lax.rsqrt(var + EPS)
    b_c = beta - mean * a_c
    o_ref[...] = (y_ref[...] * a_c + b_c).astype(o_ref.dtype)


# --------------------------------------------------------------------------- #
# Generation-aware planning
# --------------------------------------------------------------------------- #
def _tpu_vmem_bytes():
    try:
        cap = int(pltpu.get_tpu_info().vmem_capacity_bytes)
        if cap > 0:
            return cap
    except Exception:
        pass
    return 64 * 1024 * 1024            # conservative default (v7x-sized VMEM)


def _plan(n, h, w, c, itemsize):
    """Pick (channel_block, batch_block, fused?, vmem_limit_bytes).

    VMEM capacity is queried (64 MiB v7x, 128 MiB v5e/v6e); the block working set
    is capped at ~35% of it (double buffering + padded/shifted temporaries +
    compiler scratch need the rest). Channel blocks are lane-dense multiples of
    128: kept at 128 when VMEM is small (v7x) so the channel grid axis stays >=2
    "parallel" blocks for both TensorCores, allowed to grow on v5e/v6e to
    amortize per-step grid overhead. If the full (N,H,W) extent of one channel
    block does not fit, fall back to the batch-tiled two-pass schedule.
    """
    vmem = _tpu_vmem_bytes()
    budget = int(vmem * 0.35)
    limit = int(min(int(vmem * 0.85), vmem - (4 << 20)))

    def footprint(nb, cb):
        blk = nb * h * w * cb
        pad = nb * (h + 2) * w * cb
        # double-buffered in/out blocks (+ f32 intermediate) + f32 acc +
        # 3 padded shifted copies + slack for epilogue temporaries.
        return 2 * blk * (itemsize + 4) + 4 * (blk + 3 * pad) + 8 * blk

    if c % 128 != 0:
        cb = c
        # TODO(synk): C < 128 wastes vector lanes (masked stores); a W*C lane-packed
        # layout would recover lane density for tiny-channel layers.
    else:
        cb = 128
        cap = 128 if vmem <= (80 << 20) else 512
        while (cb * 2 <= cap and c % (cb * 2) == 0 and c // (cb * 2) >= 2
               and footprint(n, cb * 2) <= budget):
            cb *= 2

    if footprint(n, cb) <= budget:
        return cb, n, True, limit

    nb = 1
    for cand in range(n - 1, 0, -1):
        if n % cand == 0 and footprint(cand, cb) <= budget:
            nb = cand
            break
    # TODO(synk): if even nb=1 overflows VMEM (very large H*W), an H-tiled variant
    # with a one-row halo exchange would be required; not implemented.
    return cb, nb, False, limit


# --------------------------------------------------------------------------- #
# Wrappers
# --------------------------------------------------------------------------- #
def depthwise_conv_bn_nhwc(x, weight, bias, gamma, beta, *, c_block=None, n_block=None):
    """Preferred channels-last entry point: no layout transposes around the kernel.
    x: (N, H, W, C); weight: (C, 1, 3, 3) (PyTorch depthwise layout); bias/gamma/beta: (C,).
    The conv bias cancels exactly under training-mode BatchNorm (the batch mean
    absorbs it), so it never enters the kernel."""
    del bias
    n, h, w, c = x.shape
    cb, nb, fused, limit = _plan(n, h, w, c, x.dtype.itemsize)
    if c_block is not None:
        cb = int(c_block)
    if n_block is not None:
        nb = int(n_block)
        fused = (nb == n)
    assert c % cb == 0, "C must be divisible by the channel block"
    assert n % nb == 0, "N must be divisible by the batch block"

    w9 = jnp.transpose(weight.reshape(c, 9)).astype(jnp.float32)     # (9, C) lane-major
    g2 = gamma.reshape(1, c).astype(jnp.float32)
    b2 = beta.reshape(1, c).astype(jnp.float32)

    if fused:
        cost = pl.CostEstimate(
            flops=23 * n * h * w * c,
            transcendentals=c,
            bytes_accessed=2 * n * h * w * c * x.dtype.itemsize)
        return pl.pallas_call(
            _dwconv_bn_fused_kernel,
            out_shape=jax.ShapeDtypeStruct((n, h, w, c), x.dtype),
            grid=(c // cb,),
            in_specs=[
                pl.BlockSpec((n, h, w, cb), lambda i: (0, 0, 0, i)),
                pl.BlockSpec((9, cb), lambda i: (0, i)),
                pl.BlockSpec((1, cb), lambda i: (0, i)),
                pl.BlockSpec((1, cb), lambda i: (0, i)),
            ],
            out_specs=pl.BlockSpec((n, h, w, cb), lambda i: (0, 0, 0, i)),
            compiler_params=pltpu.CompilerParams(
                dimension_semantics=("parallel",), vmem_limit_bytes=limit),
            cost_estimate=cost,
        )(x, w9, g2, b2)

    # ---- batch-tiled two-pass path (large N*H*W per channel block / v7x VMEM) ----
    gc, gn = c // cb, n // nb
    cost1 = pl.CostEstimate(
        flops=21 * n * h * w * c, transcendentals=0,
        bytes_accessed=n * h * w * c * (x.dtype.itemsize + 4))
    y, s1, s2 = pl.pallas_call(
        _dwconv_stats_kernel,
        out_shape=(jax.ShapeDtypeStruct((n, h, w, c), jnp.float32),
                   jax.ShapeDtypeStruct((1, c), jnp.float32),
                   jax.ShapeDtypeStruct((1, c), jnp.float32)),
        grid=(gc, gn),
        in_specs=[
            pl.BlockSpec((nb, h, w, cb), lambda ci, ni: (ni, 0, 0, ci)),
            pl.BlockSpec((9, cb), lambda ci, ni: (0, ci)),
        ],
        out_specs=(
            pl.BlockSpec((nb, h, w, cb), lambda ci, ni: (ni, 0, 0, ci)),
            pl.BlockSpec((1, cb), lambda ci, ni: (0, ci)),
            pl.BlockSpec((1, cb), lambda ci, ni: (0, ci)),
        ),
        scratch_shapes=[pltpu.VMEM((1, cb), jnp.float32),
                        pltpu.VMEM((1, cb), jnp.float32)],
        compiler_params=pltpu.CompilerParams(
            dimension_semantics=("parallel", "arbitrary"), vmem_limit_bytes=limit),
        cost_estimate=cost1,
    )(x, w9)

    cost2 = pl.CostEstimate(
        flops=2 * n * h * w * c, transcendentals=c,
        bytes_accessed=n * h * w * c * (4 + x.dtype.itemsize))
    return pl.pallas_call(
        functools.partial(_bn_apply_kernel, count=float(n * h * w)),
        out_shape=jax.ShapeDtypeStruct((n, h, w, c), x.dtype),
        grid=(gc, gn),
        in_specs=[
            pl.BlockSpec((nb, h, w, cb), lambda ci, ni: (ni, 0, 0, ci)),
            pl.BlockSpec((1, cb), lambda ci, ni: (0, ci)),
            pl.BlockSpec((1, cb), lambda ci, ni: (0, ci)),
            pl.BlockSpec((1, cb), lambda ci, ni: (0, ci)),
            pl.BlockSpec((1, cb), lambda ci, ni: (0, ci)),
        ],
        out_specs=pl.BlockSpec((nb, h, w, cb), lambda ci, ni: (ni, 0, 0, ci)),
        compiler_params=pltpu.CompilerParams(
            dimension_semantics=("parallel", "parallel"), vmem_limit_bytes=limit),
        cost_estimate=cost2,
    )(y, s1, s2, g2, b2)


def depthwise_conv_bn(x, weight, bias, gamma, beta, **kw):
    """PyTorch-layout compatibility wrapper (NCHW in/out). NOTE: each transpose here
    is a full HBM round trip of the activations — prefer depthwise_conv_bn_nhwc and
    run the surrounding network channels-last."""
    x_nhwc = jnp.transpose(x, (0, 2, 3, 1))
    y = depthwise_conv_bn_nhwc(x_nhwc, weight, bias, gamma, beta, **kw)
    return jnp.transpose(y, (0, 3, 1, 2))


# --------------------------------------------------------------------------- #
# Pure-JAX reference (mirrors Conv2d(groups=C, pad=1) + BatchNorm2d in train mode)
# --------------------------------------------------------------------------- #
def _reference(x, weight, bias, gamma, beta):
    c = x.shape[1]
    y = jax.lax.conv_general_dilated(
        x, weight, window_strides=(1, 1), padding=((1, 1), (1, 1)),
        dimension_numbers=("NCHW", "OIHW", "NCHW"), feature_group_count=c,
        precision=jax.lax.Precision.HIGHEST)
    y = y + bias.reshape(1, c, 1, 1)
    mean = jnp.mean(y, axis=(0, 2, 3), keepdims=True)
    var = jnp.mean(jnp.square(y - mean), axis=(0, 2, 3), keepdims=True)
    return (y - mean) * jax.lax.rsqrt(var + EPS) * gamma.reshape(1, c, 1, 1) \
        + beta.reshape(1, c, 1, 1)


if __name__ == "__main__":
    key = jax.random.PRNGKey(0)

    # (N, C, H, W, activation dtype, forced batch block, abs tolerance)
    configs = [
        (2, 256, 16, 16, jnp.float32, None, 1e-4),     # lane-dense fused path, 2 parallel C blocks
        (2, 16, 16, 16, jnp.float32, None, 1e-4),      # small-C full-channel fallback
        (4, 256, 16, 16, jnp.float32, 2, 1e-4),        # batch-tiled two-pass path (forced)
        (2, 256, 16, 16, jnp.bfloat16, None, 1.5e-1),  # bf16 fast path (looser tolerance)
    ]
    for idx, (N, C, H, W, dt, nb, tol) in enumerate(configs):
        ks = jax.random.split(jax.random.fold_in(key, idx), 5)
        x = jax.random.normal(ks[0], (N, C, H, W), jnp.float32)
        # Deterministic synthetic parameters with nn.Conv2d(C, C, 3, padding=1, groups=C)
        # / nn.BatchNorm2d(C) shapes; not a checkpoint load.
        weight = jax.random.normal(ks[1], (C, 1, 3, 3), jnp.float32) * (1.0 / 3.0)
        bias = jax.random.normal(ks[2], (C,), jnp.float32) * 0.1
        gamma = 1.0 + 0.1 * jax.random.normal(ks[3], (C,), jnp.float32)
        beta = 0.1 * jax.random.normal(ks[4], (C,), jnp.float32)

        x_in = x.astype(dt)
        out = jax.block_until_ready(
            depthwise_conv_bn(x_in, weight, bias, gamma, beta, n_block=nb))
        ref = jax.block_until_ready(
            _reference(x_in.astype(jnp.float32), weight, bias, gamma, beta))
        assert out.shape == (N, C, H, W) and out.dtype == jnp.dtype(dt)
        err = float(jnp.max(jnp.abs(out.astype(jnp.float32) - ref)))
        assert err <= tol, f"mismatch vs reference: cfg={idx} max_err={err}"

        if idx == 0:
            # Preferred channels-last entry point: no transposes around the kernel.
            x_nhwc = jnp.transpose(x_in, (0, 2, 3, 1))
            out_nhwc = jax.block_until_ready(
                depthwise_conv_bn_nhwc(x_nhwc, weight, bias, gamma, beta))
            ref_nhwc = jnp.transpose(ref, (0, 2, 3, 1))
            err2 = float(jnp.max(jnp.abs(out_nhwc.astype(jnp.float32) - ref_nhwc)))
            assert err2 <= tol, f"NHWC path mismatch: max_err={err2}"

    # TODO(synk): BatchNorm running_mean/running_var buffer updates (training-mode
    # side effects) are not modeled; the forward output uses batch statistics only.
    print("KERNEL_OK")
</pallas_src>

<mosaic_0001>
module attributes {stable_mosaic.version = 11 : i64} {
  func.func @_dwconv_bn_fused_kernel(%arg0: i32, %arg1: memref<2x16x16x128xf32, #tpu.memory_space<vmem>>, %arg2: memref<9x128xf32, #tpu.memory_space<vmem>>, %arg3: memref<1x128xf32, #tpu.memory_space<vmem>>, %arg4: memref<1x128xf32, #tpu.memory_space<vmem>>, %arg5: memref<2x16x16x128xf32, #tpu.memory_space<vmem>>) attributes {dimension_semantics = [#tpu.dimension_semantics<parallel>], iteration_bounds = array<i64: 2>, scalar_prefetch = 0 : i64, scratch_operands = 0 : i64, tpu.core_type = #tpu.core_type<tc>, window_params = [{transform_indices = @transform_0, window_bounds = array<i64: 2, 16, 16, 128>}, {transform_indices = @transform_1, window_bounds = array<i64: 9, 128>}, {transform_indices = @transform_2, window_bounds = array<i64: 1, 128>}, {transform_indices = @transform_3, window_bounds = array<i64: 1, 128>}, {transform_indices = @transform_4, window_bounds = array<i64: 2, 16, 16, 128>}]} {
    %c0 = arith.constant 0 : index
    %c0_0 = arith.constant 0 : index
    %c0_1 = arith.constant 0 : index
    %c0_2 = arith.constant 0 : index
    %0 = vector.load %arg1[%c0, %c0_0, %c0_1, %c0_2] : memref<2x16x16x128xf32, #tpu.memory_space<vmem>>, vector<2x16x16x128xf32>
    %c0_3 = arith.constant 0 : index
    %c0_4 = arith.constant 0 : index
    %1 = vector.load %arg2[%c0_3, %c0_4] : memref<9x128xf32, #tpu.memory_space<vmem>>, vector<9x128xf32>
    %cst = arith.constant 0.000000e+00 : f32
    %2 = vector.broadcast %cst : f32 to vector<2x1x16x128xf32>
    %3 = tpu.concatenate %2, %0, %2 in 1 : vector<2x1x16x128xf32>, vector<2x16x16x128xf32>, vector<2x1x16x128xf32> -> vector<2x18x16x128xf32>
    %cst_5 = arith.constant 0.000000e+00 : f32
    %4 = vector.broadcast %cst_5 : f32 to vector<2x18x1x128xf32>
    %cst_6 = arith.constant 0.000000e+00 : f32
    %5 = vector.broadcast %cst_6 : f32 to vector<2x16x16x128xf32>
    %6 = vector.extract_strided_slice %3 {offsets = [0, 0, 0, 0], sizes = [2, 18, 15, 128], strides = [1, 1, 1, 1]} : vector<2x18x16x128xf32> to vector<2x18x15x128xf32>
    %7 = tpu.concatenate %4, %6 in 2 : vector<2x18x1x128xf32>, vector<2x18x15x128xf32> -> vector<2x18x16x128xf32>
    %8 = vector.extract_strided_slice %1 {offsets = [0, 0], sizes = [1, 128], strides = [1, 1]} : vector<9x128xf32> to vector<1x128xf32>
    %9 = vector.shape_cast %8 : vector<1x128xf32> to vector<1x1x1x128xf32>
    %10 = vector.extract_strided_slice %7 {offsets = [0, 0, 0, 0], sizes = [2, 16, 16, 128], strides = [1, 1, 1, 1]} : vector<2x18x16x128xf32> to vector<2x16x16x128xf32>
    %11 = vector.broadcast %9 : vector<1x1x1x128xf32> to vector<2x16x16x128xf32>
    %12 = arith.mulf %10, %11 : vector<2x16x16x128xf32>
    %13 = arith.addf %5, %12 : vector<2x16x16x128xf32>
    %14 = vector.extract_strided_slice %1 {offsets = [3, 0], sizes = [1, 128], strides = [1, 1]} : vector<9x128xf32> to vector<1x128xf32>
    %15 = vector.shape_cast %14 : vector<1x128xf32> to vector<1x1x1x128xf32>
    %16 = vector.extract_strided_slice %7 {offsets = [0, 1, 0, 0], sizes = [2, 16, 16, 128], strides = [1, 1, 1, 1]} : vector<2x18x16x128xf32> to vector<2x16x16x128xf32>
    %17 = vector.broadcast %15 : vector<1x1x1x128xf32> to vector<2x16x16x128xf32>
    %18 = arith.mulf %16, %17 : vector<2x16x16x128xf32>
    %19 = arith.addf %13, %18 : vector<2x16x16x128xf32>
    %20 = vector.extract_strided_slice %1 {offsets = [6, 0], sizes = [1, 128], strides = [1, 1]} : vector<9x128xf32> to vector<1x128xf32>
    %21 = vector.shape_cast %20 : vector<1x128xf32> to vector<1x1x1x128xf32>
    %22 = vector.extract_strided_slice %7 {offsets = [0, 2, 0, 0], sizes = [2, 16, 16, 128], strides = [1, 1, 1, 1]} : vector<2x18x16x128xf32> to vector<2x16x16x128xf32>
    %23 = vector.broadcast %21 : vector<1x1x1x128xf32> to vector<2x16x16x128xf32>
    %24 = arith.mulf %22, %23 : vector<2x16x16x128xf32>
    %25 = arith.addf %19, %24 : vector<2x16x16x128xf32>
    %26 = vector.extract_strided_slice %1 {offsets = [1, 0], sizes = [1, 128], strides = [1, 1]} : vector<9x128xf32> to vector<1x128xf32>
    %27 = vector.shape_cast %26 : vector<1x128xf32> to vector<1x1x1x128xf32>
    %28 = vector.extract_strided_slice %3 {offsets = [0, 0, 0, 0], sizes = [2, 16, 16, 128], strides = [1, 1, 1, 1]} : vector<2x18x16x128xf32> to vector<2x16x16x128xf32>
    %29 = vector.broadcast %27 : vector<1x1x1x128xf32> to vector<2x16x16x128xf32>
    %30 = arith.mulf %28, %29 : vector<2x16x16x128xf32>
    %31 = arith.addf %25, %30 : vector<2x16x16x128xf32>
    %32 = vector.extract_strided_slice %1 {offsets = [4, 0], sizes = [1, 128], strides = [1, 1]} : vector<9x128xf32> to vector<1x128xf32>
    %33 = vector.shape_cast %32 : vector<1x128xf32> to vector<1x1x1x128xf32>
    %34 = vector.extract_strided_slice %3 {offsets = [0, 1, 0, 0], sizes = [2, 16, 16, 128], strides = [1, 1, 1, 1]} : vector<2x18x16x128xf32> to vector<2x16x16x128xf32>
    %35 = vector.broadcast %33 : vector<1x1x1x128xf32> to vector<2x16x16x128xf32>
    %36 = arith.mulf %34, %35 : vector<2x16x16x128xf32>
    %37 = arith.addf %31, %36 : vector<2x16x16x128xf32>
    %38 = vector.extract_strided_slice %1 {offsets = [7, 0], sizes = [1, 128], strides = [1, 1]} : vector<9x128xf32> to vector<1x128xf32>
    %39 = vector.shape_cast %38 : vector<1x128xf32> to vector<1x1x1x128xf32>
    %40 = vector.extract_strided_slice %3 {offsets = [0, 2, 0, 0], sizes = [2, 16, 16, 128], strides = [1, 1, 1, 1]} : vector<2x18x16x128xf32> to vector<2x16x16x128xf32>
    %41 = vector.broadcast %39 : vector<1x1x1x128xf32> to vector<2x16x16x128xf32>
    %42 = arith.mulf %40, %41 : vector<2x16x16x128xf32>
    %43 = arith.addf %37, %42 : vector<2x16x16x128xf32>
    %44 = vector.extract_strided_slice %3 {offsets = [0, 0, 1, 0], sizes = [2, 18, 15, 128], strides = [1, 1, 1, 1]} : vector<2x18x16x128xf32> to vector<2x18x15x128xf32>
    %45 = tpu.concatenate %44, %4 in 2 : vector<2x18x15x128xf32>, vector<2x18x1x128xf32> -> vector<2x18x16x128xf32>
    %46 = vector.extract_strided_slice %1 {offsets = [2, 0], sizes = [1, 128], strides = [1, 1]} : vector<9x128xf32> to vector<1x128xf32>
    %47 = vector.shape_cast %46 : vector<1x128xf32> to vector<1x1x1x128xf32>
    %48 = vector.extract_strided_slice %45 {offsets = [0, 0, 0, 0], sizes = [2, 16, 16, 128], strides = [1, 1, 1, 1]} : vector<2x18x16x128xf32> to vector<2x16x16x128xf32>
    %49 = vector.broadcast %47 : vector<1x1x1x128xf32> to vector<2x16x16x128xf32>
    %50 = arith.mulf %48, %49 : vector<2x16x16x128xf32>
    %51 = arith.addf %43, %50 : vector<2x16x16x128xf32>
    %52 = vector.extract_strided_slice %1 {offsets = [5, 0], sizes = [1, 128], strides = [1, 1]} : vector<9x128xf32> to vector<1x128xf32>
    %53 = vector.shape_cast %52 : vector<1x128xf32> to vector<1x1x1x128xf32>
    %54 = vector.extract_strided_slice %45 {offsets = [0, 1, 0, 0], sizes = [2, 16, 16, 128], strides = [1, 1, 1, 1]} : vector<2x18x16x128xf32> to vector<2x16x16x128xf32>
    %55 = vector.broadcast %53 : vector<1x1x1x128xf32> to vector<2x16x16x128xf32>
    %56 = arith.mulf %54, %55 : vector<2x16x16x128xf32>
    %57 = arith.addf %51, %56 : vector<2x16x16x128xf32>
    %58 = vector.extract_strided_slice %1 {offsets = [8, 0], sizes = [1, 128], strides = [1, 1]} : vector<9x128xf32> to vector<1x128xf32>
    %59 = vector.shape_cast %58 : vector<1x128xf32> to vector<1x1x1x128xf32>
    %60 = vector.extract_strided_slice %45 {offsets = [0, 2, 0, 0], sizes = [2, 16, 16, 128], strides = [1, 1, 1, 1]} : vector<2x18x16x128xf32> to vector<2x16x16x128xf32>
    %61 = vector.broadcast %59 : vector<1x1x1x128xf32> to vector<2x16x16x128xf32>
    %62 = arith.mulf %60, %61 : vector<2x16x16x128xf32>
    %63 = arith.addf %57, %62 : vector<2x16x16x128xf32>
    %cst_7 = arith.constant dense<0.000000e+00> : vector<128xf32>
    %64 = vector.multi_reduction <add>, %63, %cst_7 [0, 1, 2] : vector<2x16x16x128xf32> to vector<128xf32>
    %65 = vector.shape_cast %64 : vector<128xf32> to vector<1x1x1x128xf32>
    %cst_8 = arith.constant 5.120000e+02 : f32
    %66 = vector.broadcast %cst_8 : f32 to vector<1x1x1x128xf32>
    %67 = arith.divf %65, %66 : vector<1x1x1x128xf32>
    %68 = vector.broadcast %67 : vector<1x1x1x128xf32> to vector<2x16x16x128xf32>
    %69 = arith.subf %63, %68 : vector<2x16x16x128xf32>
    %70 = arith.mulf %69, %69 : vector<2x16x16x128xf32>
    %cst_9 = arith.constant dense<0.000000e+00> : vector<128xf32>
    %71 = vector.multi_reduction <add>, %70, %cst_9 [0, 1, 2] : vector<2x16x16x128xf32> to vector<128xf32>
    %72 = vector.shape_cast %71 : vector<128xf32> to vector<1x1x1x128xf32>
    %cst_10 = arith.constant 5.120000e+02 : f32
    %73 = vector.broadcast %cst_10 : f32 to vector<1x1x1x128xf32>
    %74 = arith.divf %72, %73 : vector<1x1x1x128xf32>
    %c0_11 = arith.constant 0 : index
    %c0_12 = arith.constant 0 : index
    %75 = vector.load %arg3[%c0_11, %c0_12] : memref<1x128xf32, #tpu.memory_space<vmem>>, vector<1x128xf32>
    %76 = vector.shape_cast %75 : vector<1x128xf32> to vector<1x1x1x128xf32>
    %c0_13 = arith.constant 0 : index
    %c0_14 = arith.constant 0 : index
    %77 = vector.load %arg4[%c0_13, %c0_14] : memref<1x128xf32, #tpu.memory_space<vmem>>, vector<1x128xf32>
    %78 = vector.shape_cast %77 : vector<1x128xf32> to vector<1x1x1x128xf32>
    %cst_15 = arith.constant 9.99999974E-6 : f32
    %79 = vector.broadcast %cst_15 : f32 to vector<1x1x1x128xf32>
    %80 = arith.addf %74, %79 : vector<1x1x1x128xf32>
    %81 = math.rsqrt %80 : vector<1x1x1x128xf32>
    %82 = arith.mulf %76, %81 : vector<1x1x1x128xf32>
    %83 = arith.mulf %67, %82 : vector<1x1x1x128xf32>
    %84 = arith.subf %78, %83 : vector<1x1x1x128xf32>
    %85 = vector.broadcast %82 : vector<1x1x1x128xf32> to vector<2x16x16x128xf32>
    %86 = arith.mulf %63, %85 : vector<2x16x16x128xf32>
    %87 = vector.broadcast %84 : vector<1x1x1x128xf32> to vector<2x16x16x128xf32>
    %88 = arith.addf %86, %87 : vector<2x16x16x128xf32>
    %c0_16 = arith.constant 0 : index
    %c0_17 = arith.constant 0 : index
    %c0_18 = arith.constant 0 : index
    %c0_19 = arith.constant 0 : index
    %89 = vector.load %arg5[%c0_16, %c0_17, %c0_18, %c0_19] : memref<2x16x16x128xf32, #tpu.memory_space<vmem>>, vector<2x16x16x128xf32>
    tpu.vector_store %arg5[%c0_16, %c0_17, %c0_18, %c0_19], %88 {strides = array<i32>} : memref<2x16x16x128xf32, #tpu.memory_space<vmem>>, vector<2x16x16x128xf32>,
    return
  }
  func.func @transform_0(%arg0: i32) -> (i32, i32, i32, i32) {
    %c0_i32 = arith.constant 0 : i32
    %c0_i32_0 = arith.constant 0 : i32
    %c0_i32_1 = arith.constant 0 : i32
    %c0_i32_2 = arith.constant 0 : i32
    return %c0_i32, %c0_i32_0, %c0_i32_1, %arg0 : i32, i32, i32, i32
  }
  func.func @transform_1(%arg0: i32) -> (i32, i32) {
    %c0_i32 = arith.constant 0 : i32
    %c0_i32_0 = arith.constant 0 : i32
    return %c0_i32, %arg0 : i32, i32
  }
  func.func @transform_2(%arg0: i32) -> (i32, i32) {
    %c0_i32 = arith.constant 0 : i32
    %c0_i32_0 = arith.constant 0 : i32
    return %c0_i32, %arg0 : i32, i32
  }
  func.func @transform_3(%arg0: i32) -> (i32, i32) {
    %c0_i32 = arith.constant 0 : i32
    %c0_i32_0 = arith.constant 0 : i32
    return %c0_i32, %arg0 : i32, i32
  }
  func.func @transform_4(%arg0: i32) -> (i32, i32, i32, i32) {
    %c0_i32 = arith.constant 0 : i32
    %c0_i32_0 = arith.constant 0 : i32
    %c0_i32_1 = arith.constant 0 : i32
    %c0_i32_2 = arith.constant 0 : i32
    return %c0_i32, %c0_i32_0, %c0_i32_1, %arg0 : i32, i32, i32, i32
  }
}

</mosaic_0001>

<llo_original>
// kernel: tpu_custom_call.1
$region0: #{tpu_custom_call.1}
  #allocation0 [shape = 'u32[]', space=smem, size = 0x4, offset = 0x4, fixed_abs, tag = 'smem constant byte address 0x4 - core index']
  #allocation1 [shape = 'u32[144,128]{1,0:T(1,128)}', space=vmem, size = 0x12000, scoped, tag = 'internal scratch']
  %s0 = inlined_call_operand.hbm [shape: f32[2,16,16,256], index: 0, kind: input, shape index: {}]
  %s1 = inlined_call_operand.hbm [shape: f32[9,256], index: 1, kind: input, shape index: {}]
  %s2 = inlined_call_operand.vmem [shape: f32[1,256], index: 2, kind: input, shape index: {}]
  %s3 = inlined_call_operand.vmem [shape: f32[1,256], index: 3, kind: input, shape index: {}]
  %s4 = inlined_call_operand.hbm [shape: f32[2,16,16,256], index: 4, kind: output, shape index: {}]
  %s5 = sld [smem:[#allocation0]]
  $region57: #{tpu_custom_call.1} parent=0
    _
  %s7 = ssub.s32 1, %s5
  %s8 = scalar_select 0, %s7, %s5
  $region1: #{tpu_custom_call.1} parent=0
    #allocation2 [shape = 'u8[524288]{0}', space=vmem, size = 0x80000, scoped, tag = 'input window, operand 0']
    #allocation3 [shape = 's32[2]{0}', space=sflag, size = 0x8, scoped, tag = 'scoped memory for tpu_custom_call.1']
    #allocation4 [shape = 's32[2]{0}', space=sflag, size = 0x8, scoped, tag = 'scoped memory for tpu_custom_call.1']
    #allocation5 [shape = 'u8[16384]{0}', space=vmem, size = 0x4000, scoped, tag = 'input window, operand 1']
    #allocation6 [shape = 's32[2]{0}', space=sflag, size = 0x8, scoped, tag = 'scoped memory for tpu_custom_call.1']
    #allocation7 [shape = 'u8[524288]{0}', space=vmem, size = 0x80000, scoped, tag = 'output window, operand 0']
    %9 = vsyncpa [#allocation3], 0
    %s10 = scalar_lea.sflag [#allocation3], 1
    %11 = vsyncpa %s10, 0
    %12 = vsyncpa [#allocation6], 0
    %s13 = scalar_lea.sflag [#allocation6], 1
    %14 = vsyncpa %s13, 0
    %15 = vsyncpa [#allocation4], 0
    %s16 = scalar_lea.sflag [#allocation4], 1
    %17 = vsyncpa %s16, 0
    loop: start=0, step=1, limit=4
    $region2: #{tpu_custom_call.1} parent=1 // loop_pre_header
      _
    $region3: #{tpu_custom_call.1} parent=1 // loop_header
      %s19 = sphi 0, %s23
      %p20 = scmp.ge.s32.totalorder %s19, 4
      %s29 = sphi 0, %s31
      %s32 = sphi 0, %s29
      %s33 = sphi 0, %s32
      %s49 = sphi 0, %s33
      %s55 = sphi 0, %s57
      %s58 = sphi 0, %s55
      %s59 = sphi 0, %s58
      %s75 = sphi 0, %s59
      %s81 = sphi 0, %s83
      %s84 = sphi 0, %s81
      %s85 = sphi 0, %s84
      %s101 = sphi 0, %s85
      %s107 = sphi 0, %s109
      %s110 = sphi 0, %s107
      %s111 = sphi 0, %s110
      %s127 = sphi 0, %s111
      %s133 = sphi 0, %s135
      %s136 = sphi 0, %s133
      %s137 = sphi 0, %s136
      %s153 = sphi 0, %s137
    $region4: #{tpu_custom_call.1} parent=1 // loop_header_branch
      %22 = sbr.rel (%p20) target = $region8
    $region5: #{tpu_custom_call.1} parent=1 // loop_body
      %s24 = ssub.s32 %s19, 1
      %s25 = ssub.s32 %s19, 2
      %s26 = sadd.s32 %s19, 1
      %s27 = ssub.s32 %s19, %s26
      %p28 = scmp.eq.s32.totalorder %s27, 0
      %s30 = sadd.s32 %s29, 1
      %s31 = scalar_select %p28, %s29, %s30
      %p34 = pneg %p28
      %p35 = scmp.eq.s32.totalorder %s19, 1
      %p36 = por %p34, %p35
      %p37 = scmp.ne.s32.totalorder %s29, %s32
      %p38 = scmp.eq.s32.totalorder %s19, 0
      %p39 = por %p37, %p38
      %p40 = scmp.ne.s32.totalorder %s29, %s32
      %p41 = scmp.eq.s32.totalorder %s24, 1
      %p42 = por %p40, %p41
      %p43 = scmp.ne.s32.totalorder %s32, %s33
      %p44 = scmp.eq.s32.totalorder %s24, 0
      %p45 = por %p43, %p44
      %p46 = scmp.ne.s32.totalorder %s32, %s33
      %p47 = scmp.eq.s32.totalorder %s25, 1
      %p48 = por %p46, %p47
      %p50 = scmp.ne.s32.totalorder %s33, %s49
      %p51 = scmp.eq.s32.totalorder %s25, 0
      %p52 = por %p50, %p51
      %s53 = ssub.s32 %s19, %s26
      %p54 = scmp.eq.s32.totalorder %s53, 0
      %s56 = sadd.s32 %s55, 1
      %s57 = scalar_select %p54, %s55, %s56
      %p60 = pneg %p54
      %p61 = scmp.eq.s32.totalorder %s19, 1
      %p62 = por %p60, %p61
      %p63 = scmp.ne.s32.totalorder %s55, %s58
      %p64 = scmp.eq.s32.totalorder %s19, 0
      %p65 = por %p63, %p64
      %p66 = scmp.ne.s32.totalorder %s55, %s58
      %p67 = scmp.eq.s32.totalorder %s24, 1
      %p68 = por %p66, %p67
      %p69 = scmp.ne.s32.totalorder %s58, %s59
      %p70 = scmp.eq.s32.totalorder %s24, 0
      %p71 = por %p69, %p70
      %p72 = scmp.ne.s32.totalorder %s58, %s59
      %p73 = scmp.eq.s32.totalorder %s25, 1
      %p74 = por %p72, %p73
      %p76 = scmp.ne.s32.totalorder %s59, %s75
      %p77 = scmp.eq.s32.totalorder %s25, 0
      %p78 = por %p76, %p77
      %s79 = ssub.s32 %s19, %s26
      %p80 = scmp.eq.s32.totalorder %s79, 0
      %s82 = sadd.s32 %s81, 1
      %s83 = scalar_select %p80, %s81, %s82
      %p86 = pneg %p80
      %p87 = scmp.eq.s32.totalorder %s19, 1
      %p88 = por %p86, %p87
      %p89 = scmp.ne.s32.totalorder %s81, %s84
      %p90 = scmp.eq.s32.totalorder %s19, 0
      %p91 = por %p89, %p90
      %p92 = scmp.ne.s32.totalorder %s81, %s84
      %p93 = scmp.eq.s32.totalorder %s24, 1
      %p94 = por %p92, %p93
      %p95 = scmp.ne.s32.totalorder %s84, %s85
      %p96 = scmp.eq.s32.totalorder %s24, 0
      %p97 = por %p95, %p96
      %p98 = scmp.ne.s32.totalorder %s84, %s85
      %p99 = scmp.eq.s32.totalorder %s25, 1
      %p100 = por %p98, %p99
      %p102 = scmp.ne.s32.totalorder %s85, %s101
      %p103 = scmp.eq.s32.totalorder %s25, 0
      %p104 = por %p102, %p103
      %s105 = ssub.s32 %s19, %s26
      %p106 = scmp.eq.s32.totalorder %s105, 0
      %s108 = sadd.s32 %s107, 1
      %s109 = scalar_select %p106, %s107, %s108
      %p112 = pneg %p106
      %p113 = scmp.eq.s32.totalorder %s19, 1
      %p114 = por %p112, %p113
      %p115 = scmp.ne.s32.totalorder %s107, %s110
      %p116 = scmp.eq.s32.totalorder %s19, 0
      %p117 = por %p115, %p116
      %p118 = scmp.ne.s32.totalorder %s107, %s110
      %p119 = scmp.eq.s32.totalorder %s24, 1
      %p120 = por %p118, %p119
      %p121 = scmp.ne.s32.totalorder %s110, %s111
      %p122 = scmp.eq.s32.totalorder %s24, 0
      %p123 = por %p121, %p122
      %p124 = scmp.ne.s32.totalorder %s110, %s111
      %p125 = scmp.eq.s32.totalorder %s25, 1
      %p126 = por %p124, %p125
      %p128 = scmp.ne.s32.totalorder %s111, %s127
      %p129 = scmp.eq.s32.totalorder %s25, 0
      %p130 = por %p128, %p129
      %s131 = ssub.s32 %s19, %s26
      %p132 = scmp.eq.s32.totalorder %s131, 0
      %s134 = sadd.s32 %s133, 1
      %s135 = scalar_select %p132, %s133, %s134
      %p138 = pneg %p132
      %p139 = scmp.eq.s32.totalorder %s19, 1
      %p140 = por %p138, %p139
      %p141 = scmp.ne.s32.totalorder %s133, %s136
      %p142 = scmp.eq.s32.totalorder %s19, 0
      %p143 = por %p141, %p142
      %p144 = scmp.ne.s32.totalorder %s133, %s136
      %p145 = scmp.eq.s32.totalorder %s24, 1
      %p146 = por %p144, %p145
      %p147 = scmp.ne.s32.totalorder %s136, %s137
      %p148 = scmp.eq.s32.totalorder %s24, 0
      %p149 = por %p147, %p148
      %p150 = scmp.ne.s32.totalorder %s136, %s137
      %p151 = scmp.eq.s32.totalorder %s25, 1
      %p152 = por %p150, %p151
      %p154 = scmp.ne.s32.totalorder %s137, %s153
      %p155 = scmp.eq.s32.totalorder %s25, 0
      %p156 = por %p154, %p155
      %p157 = scmp.le.s32.totalorder 1, %s19
      %p158 = scmp.lt.s32.totalorder %s19, 3
      %p159 = pnand %p157, %p158
      %p160 = pneg %p159
      // Predicated region
      $region9: #{tpu_custom_call.1} parent=5 // pred_check
        _
      $region10: #{tpu_custom_call.1} parent=5 // pred_check_branch
        %162 = sbr.rel (%p159) target = $region12
      $region11: #{tpu_custom_call.1} parent=5 // pred_region
        %s163 = ssub.s32 %s19, 1
      $region12: #{tpu_custom_call.1} parent=5 // pred_fallthru
        _
      %p164 = scmp.lt.s32.totalorder %s19, 2
      // Predicated region
      $region13: #{tpu_custom_call.1} parent=5 // pred_check
        %p165 = pneg %p164
      $region14: #{tpu_custom_call.1} parent=5 // pred_check_branch
        %167 = sbr.rel (%p165) target = $region16
      $region15: #{tpu_custom_call.1} parent=5 // pred_region
        // Predicated region
        $region17: #{tpu_custom_call.1} parent=15 // pred_check
          %p168 = pneg %p39
        $region18: #{tpu_custom_call.1} parent=15 // pred_check_branch
          %170 = sbr.rel (%p168) target = $region20
        $region19: #{tpu_custom_call.1} parent=15 // pred_region
          %s171 = sand.u32 %s29, 1
          %s172 = scalar_lea.sflag [#allocation3], %s171
          %s173 = sand.u32 %s29, 1
          %s174 = smul.addr %s173, 512
          %s175 = scalar_lea.vmem [#allocation2], %s174
          %s177 = ssub.s32 8192, 8192
          %178 = vsyncadd %s172, %s177
          %s179 = smul.addr %s19, 128
          %s180 = scalar_lea.hbm %s0, %s179
          %s181 = sshll.u32 %s175, 4
          %s182 = int_to_ptr.vmem [resolvable:$true] %s181
          %187 = dma.hbm_to_vmem [thread:$0]  %s180, 8192, %s182, %s172, 256, 128, 8
        $region20: #{tpu_custom_call.1} parent=15 // pred_fallthru
          _
        // Predicated region
        $region21: #{tpu_custom_call.1} parent=15 // pred_check
          %p188 = pneg %p65
        $region22: #{tpu_custom_call.1} parent=15 // pred_check_branch
          %190 = sbr.rel (%p188) target = $region24
        $region23: #{tpu_custom_call.1} parent=15 // pred_region
          %s191 = sand.u32 %s55, 1
          %s192 = scalar_lea.sflag [#allocation6], %s191
          %s193 = sand.u32 %s55, 1
          %s194 = smul.addr %s193, 16
          %s195 = scalar_lea.vmem [#allocation5], %s194
          %s197 = ssub.s32 256, 256
          %198 = vsyncadd %s192, %s197
          %s199 = smul.addr %s19, 128
          %s200 = scalar_lea.hbm %s1, %s199
          %s201 = sshll.u32 %s195, 4
          %s202 = int_to_ptr.vmem [resolvable:$true] %s201
          %207 = dma.hbm_to_vmem [thread:$0]  %s200, 256, %s202, %s192, 256, 128, 8
        $region24: #{tpu_custom_call.1} parent=15 // pred_fallthru
          _
        // Predicated region
        $region25: #{tpu_custom_call.1} parent=15 // pred_check
          %p208 = pneg %p91
        $region26: #{tpu_custom_call.1} parent=15 // pred_check_branch
          %210 = sbr.rel (%p208) target = $region28
        $region27: #{tpu_custom_call.1} parent=15 // pred_region
          %p211 = scmp.lt.s32.totalorder %s19, 1
          %s212 = scalar_select %p211, %s19, 1
          %s213 = scalar_lea.vmem %s2, %s212
        $region28: #{tpu_custom_call.1} parent=15 // pred_fallthru
          _
        // Predicated region
        $region29: #{tpu_custom_call.1} parent=15 // pred_check
          %p214 = pneg %p117
        $region30: #{tpu_custom_call.1} parent=15 // pred_check_branch
          %216 = sbr.rel (%p214) target = $region32
        $region31: #{tpu_custom_call.1} parent=15 // pred_region
          %p217 = scmp.lt.s32.totalorder %s19, 1
          %s218 = scalar_select %p217, %s19, 1
          %s219 = scalar_lea.vmem %s3, %s218
        $region32: #{tpu_custom_call.1} parent=15 // pred_fallthru
          _
      $region16: #{tpu_custom_call.1} parent=5 // pred_fallthru
        _
      %p220 = scmp.le.s32.totalorder 1, %s19
      %p221 = scmp.lt.s32.totalorder %s19, 3
      %p222 = pnand %p220, %p221
      %p223 = pneg %p222
      // Predicated region
      $region33: #{tpu_custom_call.1} parent=5 // pred_check
        _
      $region34: #{tpu_custom_call.1} parent=5 // pred_check_branch
        %225 = sbr.rel (%p222) target = $region36
      $region35: #{tpu_custom_call.1} parent=5 // pred_region
        %s226 = ssub.s32 %s19, 1
        %s227 = sand.u32 %s32, 1
        %s228 = scalar_lea.sflag [#allocation3], %s227
        %s229 = sand.u32 %s32, 1
        %s230 = smul.addr %s229, 512
        %s231 = scalar_lea.vmem [#allocation2], %s230
        // Predicated region
        $region37: #{tpu_custom_call.1} parent=35 // pred_check
          %p232 = pneg %p45
        $region38: #{tpu_custom_call.1} parent=35 // pred_check_branch
          %234 = sbr.rel (%p232) target = $region40
        $region39: #{tpu_custom_call.1} parent=35 // pred_region
          %235 = dma.done %s228, 8192
        $region40: #{tpu_custom_call.1} parent=35 // pred_fallthru
          _
        %s236 = sand.u32 %s58, 1
        %s237 = scalar_lea.sflag [#allocation6], %s236
        %s238 = sand.u32 %s58, 1
        %s239 = smul.addr %s238, 16
        %s240 = scalar_lea.vmem [#allocation5], %s239
        // Predicated region
        $region41: #{tpu_custom_call.1} parent=35 // pred_check
          %p241 = pneg %p71
        $region42: #{tpu_custom_call.1} parent=35 // pred_check_branch
          %243 = sbr.rel (%p241) target = $region44
        $region43: #{tpu_custom_call.1} parent=35 // pred_region
          %244 = dma.done %s237, 256
        $region44: #{tpu_custom_call.1} parent=35 // pred_fallthru
          _
        %s245 = sand.u32 %s32, 1
        %s246 = scalar_lea.sflag [#allocation3], %s245
        %s247 = sand.u32 %s32, 1
        %s248 = smul.addr %s247, 512
        %s249 = scalar_lea.vmem [#allocation2], %s248
        %p250 = pneg %p45
        %p251 = pneg %p42
        %s252 = sand.u32 %s58, 1
        %s253 = scalar_lea.sflag [#allocation6], %s252
        %s254 = sand.u32 %s58, 1
        %s255 = smul.addr %s254, 16
        %s256 = scalar_lea.vmem [#allocation5], %s255
        %p257 = pneg %p71
        %p258 = pneg %p68
        %p259 = scmp.lt.s32.totalorder %s24, 1
        %s260 = scalar_select %p259, %s24, 1
        %s261 = scalar_lea.vmem %s2, %s260
        %p262 = pneg %p97
        %p263 = pneg %p94
        %p264 = scmp.lt.s32.totalorder %s24, 1
        %s265 = scalar_select %p264, %s24, 1
        %s266 = scalar_lea.vmem %s3, %s265
        %p267 = pneg %p123
        %p268 = pneg %p120
        %p269 = pneg %p149
        %p270 = pneg %p146
        %s271 = sand.u32 %s136, 1
        %s272 = scalar_lea.sflag [#allocation4], %s271
        %s273 = sand.u32 %s136, 1
        %s274 = smul.addr %s273, 512
        %s275 = scalar_lea.vmem [#allocation7], %s274
        %p276 = scmp.lt.s32.totalorder %s24, 1
        %s277 = scalar_select %p276, %s24, 1
        %s278 = scalar_lea.vmem %s2, %s277
        %p279 = scmp.lt.s32.totalorder %s24, 1
        %s280 = scalar_select %p279, %s24, 1
        %s281 = scalar_lea.vmem %s3, %s280
        %v282 = vld [vmem:[%s231] sm:$0xff]
        %v283 = vld [vmem:[%s231 + $0x8] sm:$0xff]
        %v284 = vld [vmem:[%s231 + $0x10] sm:$0xff]
        %v285 = vld [vmem:[%s231 + $0x18] sm:$0xff]
        %v286 = vld [vmem:[%s231 + $0x20] sm:$0xff]
        %v287 = vld [vmem:[%s231 + $0x28] sm:$0xff]
        %v288 = vld [vmem:[%s231 + $0x30] sm:$0xff]
        %v289 = vld [vmem:[%s231 + $0x38] sm:$0xff]
        %v290 = vld [vmem:[%s231 + $0x40] sm:$0xff]
        %v291 = vld [vmem:[%s231 + $0x48] sm:$0xff]
        %v292 = vld [vmem:[%s231 + $0x50] sm:$0xff]
        %v293 = vld [vmem:[%s231 + $0x58] sm:$0xff]
        %v294 = vld [vmem:[%s231 + $0x60] sm:$0xff]
        %v295 = vld [vmem:[%s231 + $0x68] sm:$0xff]
        %v296 = vld [vmem:[%s231 + $0x70] sm:$0xff]
        %v297 = vld [vmem:[%s231 + $0x78] sm:$0xff]
        %v298 = vld [vmem:[%s231 + $0x80] sm:$0xff]
        %v299 = vld [vmem:[%s231 + $0x88] sm:$0xff]
        %v300 = vld [vmem:[%s231 + $0x90] sm:$0xff]
        %v301 = vld [vmem:[%s231 + $0x98] sm:$0xff]
        %v302 = vld [vmem:[%s231 + $0xa0] sm:$0xff]
        %v303 = vld [vmem:[%s231 + $0xa8] sm:$0xff]
        %v304 = vld [vmem:[%s231 + $0xb0] sm:$0xff]
        %v305 = vld [vmem:[%s231 + $0xb8] sm:$0xff]
        %v306 = vld [vmem:[%s231 + $0xc0] sm:$0xff]
        %v307 = vld [vmem:[%s231 + $0xc8] sm:$0xff]
        %v308 = vld [vmem:[%s231 + $0xd0] sm:$0xff]
        %v309 = vld [vmem:[%s231 + $0xd8] sm:$0xff]
        %v310 = vld [vmem:[%s231 + $0xe0] sm:$0xff]
        %v311 = vld [vmem:[%s231 + $0xe8] sm:$0xff]
        %v312 = vld [vmem:[%s231 + $0xf0] sm:$0xff]
        %v313 = vld [vmem:[%s231 + $0xf8] sm:$0xff]
        %v314 = vld [vmem:[%s231 + $0x100] sm:$0xff]
        %v315 = vld [vmem:[%s231 + $0x108] sm:$0xff]
        %v316 = vld [vmem:[%s231 + $0x110] sm:$0xff]
        %v317 = vld [vmem:[%s231 + $0x118] sm:$0xff]
        %v318 = vld [vmem:[%s231 + $0x120] sm:$0xff]
        %v319 = vld [vmem:[%s231 + $0x128] sm:$0xff]
        %v320 = vld [vmem:[%s231 + $0x130] sm:$0xff]
        %v321 = vld [vmem:[%s231 + $0x138] sm:$0xff]
        %v322 = vld [vmem:[%s231 + $0x140] sm:$0xff]
        %v323 = vld [vmem:[%s231 + $0x148] sm:$0xff]
        %v324 = vld [vmem:[%s231 + $0x150] sm:$0xff]
        %v325 = vld [vmem:[%s231 + $0x158] sm:$0xff]
        %v326 = vld [vmem:[%s231 + $0x160] sm:$0xff]
        %v327 = vld [vmem:[%s231 + $0x168] sm:$0xff]
        %v328 = vld [vmem:[%s231 + $0x170] sm:$0xff]
        %v329 = vld [vmem:[%s231 + $0x178] sm:$0xff]
        %v330 = vld [vmem:[%s231 + $0x180] sm:$0xff]
        %v331 = vld [vmem:[%s231 + $0x188] sm:$0xff]
        %v332 = vld [vmem:[%s231 + $0x190] sm:$0xff]
        %v333 = vld [vmem:[%s231 + $0x198] sm:$0xff]
        %v334 = vld [vmem:[%s231 + $0x1a0] sm:$0xff]
        %v335 = vld [vmem:[%s231 + $0x1a8] sm:$0xff]
        %v336 = vld [vmem:[%s231 + $0x1b0] sm:$0xff]
        %v337 = vld [vmem:[%s231 + $0x1b8] sm:$0xff]
        %v338 = vld [vmem:[%s231 + $0x1c0] sm:$0xff]
        %v339 = vld [vmem:[%s231 + $0x1c8] sm:$0xff]
        %v340 = vld [vmem:[%s231 + $0x1d0] sm:$0xff]
        %v341 = vld [vmem:[%s231 + $0x1d8] sm:$0xff]
        %v342 = vld [vmem:[%s231 + $0x1e0] sm:$0xff]
        %v343 = vld [vmem:[%s231 + $0x1e8] sm:$0xff]
        %v344 = vld [vmem:[%s231 + $0x1f0] sm:$0xff]
        %v345 = vld [vmem:[%s231 + $0x1f8] sm:$0xff]
        %v346 = vld [vmem:[%s240] sm:$0xff]
        %v347 = vld [vmem:[%s240 + $0x8] sm:$0x1]
        %vm413 = vcmask 1040384
        %v414 = vrot.slane 0.0, 7
        %v415 = vsel %vm413, %v414, %v414
        %v416 = vrot.slane %v282, 7
        %v417 = vrot.slane %v283, 7
        %v418 = vsel %vm413, %v416, %v417
        %v419 = vrot.slane %v284, 7
        %v420 = vrot.slane %v285, 7
        %v421 = vsel %vm413, %v419, %v420
        %v422 = vrot.slane %v286, 7
        %v423 = vrot.slane %v287, 7
        %v424 = vsel %vm413, %v422, %v423
        %v425 = vrot.slane %v288, 7
        %v426 = vrot.slane %v289, 7
        %v427 = vsel %vm413, %v425, %v426
        %v428 = vrot.slane %v290, 7
        %v429 = vrot.slane %v291, 7
        %v430 = vsel %vm413, %v428, %v429
        %v431 = vrot.slane %v292, 7
        %v432 = vrot.slane %v293, 7
        %v433 = vsel %vm413, %v431, %v432
        %v434 = vrot.slane %v294, 7
        %v435 = vrot.slane %v295, 7
        %v436 = vsel %vm413, %v434, %v435
        %v437 = vrot.slane %v296, 7
        %v438 = vrot.slane %v297, 7
        %v439 = vsel %vm413, %v437, %v438
        %v440 = vrot.slane %v298, 7
        %v441 = vrot.slane %v299, 7
        %v442 = vsel %vm413, %v440, %v441
        %v443 = vrot.slane %v300, 7
        %v444 = vrot.slane %v301, 7
        %v445 = vsel %vm413, %v443, %v444
        %v446 = vrot.slane %v302, 7
        %v447 = vrot.slane %v303, 7
        %v448 = vsel %vm413, %v446, %v447
        %v449 = vrot.slane %v304, 7
        %v450 = vrot.slane %v305, 7
        %v451 = vsel %vm413, %v449, %v450
        %v452 = vrot.slane %v306, 7
        %v453 = vrot.slane %v307, 7
        %v454 = vsel %vm413, %v452, %v453
        %v455 = vrot.slane %v308, 7
        %v456 = vrot.slane %v309, 7
        %v457 = vsel %vm413, %v455, %v456
        %v458 = vrot.slane %v310, 7
        %v459 = vrot.slane %v311, 7
        %v460 = vsel %vm413, %v458, %v459
        %v461 = vrot.slane %v312, 7
        %v462 = vrot.slane %v313, 7
        %v463 = vsel %vm413, %v461, %v462
        %v464 = vrot.slane %v314, 7
        %v465 = vrot.slane %v315, 7
        %v466 = vsel %vm413, %v464, %v465
        %v467 = vrot.slane %v316, 7
        %v468 = vrot.slane %v317, 7
        %v469 = vsel %vm413, %v467, %v468
        %v470 = vrot.slane %v318, 7
        %v471 = vrot.slane %v319, 7
        %v472 = vsel %vm413, %v470, %v471
        %v473 = vrot.slane %v320, 7
        %v474 = vrot.slane %v321, 7
        %v475 = vsel %vm413, %v473, %v474
        %v476 = vrot.slane %v322, 7
        %v477 = vrot.slane %v323, 7
        %v478 = vsel %vm413, %v476, %v477
        %v479 = vrot.slane %v324, 7
        %v480 = vrot.slane %v325, 7
        %v481 = vsel %vm413, %v479, %v480
        %v482 = vrot.slane %v326, 7
        %v483 = vrot.slane %v327, 7
        %v484 = vsel %vm413, %v482, %v483
        %v485 = vrot.slane %v328, 7
        %v486 = vrot.slane %v329, 7
        %v487 = vsel %vm413, %v485, %v486
        %v488 = vrot.slane %v330, 7
        %v489 = vrot.slane %v331, 7
        %v490 = vsel %vm413, %v488, %v489
        %v491 = vrot.slane %v332, 7
        %v492 = vrot.slane %v333, 7
        %v493 = vsel %vm413, %v491, %v492
        %v494 = vrot.slane %v334, 7
        %v495 = vrot.slane %v335, 7
        %v496 = vsel %vm413, %v494, %v495
        %v497 = vrot.slane %v336, 7
        %v498 = vrot.slane %v337, 7
        %v499 = vsel %vm413, %v497, %v498
        %v500 = vrot.slane %v338, 7
        %v501 = vrot.slane %v339, 7
        %v502 = vsel %vm413, %v500, %v501
        %v503 = vrot.slane %v340, 7
        %v504 = vrot.slane %v341, 7
        %v505 = vsel %vm413, %v503, %v504
        %v506 = vrot.slane %v342, 7
        %v507 = vrot.slane %v343, 7
        %v508 = vsel %vm413, %v506, %v507
        %v509 = vrot.slane %v344, 7
        %v510 = vrot.slane %v345, 7
        %v511 = vsel %vm413, %v509, %v510
        %v578 = vsel %vm413, 0.0, %v414
        %v579 = vsel %vm413, 0.0, %v416
        %v580 = vsel %vm413, 0.0, %v419
        %v581 = vsel %vm413, 0.0, %v422
        %v582 = vsel %vm413, 0.0, %v425
        %v583 = vsel %vm413, 0.0, %v428
        %v584 = vsel %vm413, 0.0, %v431
        %v585 = vsel %vm413, 0.0, %v434
        %v586 = vsel %vm413, 0.0, %v437
        %v587 = vsel %vm413, 0.0, %v440
        %v588 = vsel %vm413, 0.0, %v443
        %v589 = vsel %vm413, 0.0, %v446
        %v590 = vsel %vm413, 0.0, %v449
        %v591 = vsel %vm413, 0.0, %v452
        %v592 = vsel %vm413, 0.0, %v455
        %v593 = vsel %vm413, 0.0, %v458
        %v594 = vsel %vm413, 0.0, %v461
        %v595 = vsel %vm413, 0.0, %v464
        %v596 = vsel %vm413, 0.0, %v467
        %v597 = vsel %vm413, 0.0, %v470
        %v598 = vsel %vm413, 0.0, %v473
        %v599 = vsel %vm413, 0.0, %v476
        %v600 = vsel %vm413, 0.0, %v479
        %v601 = vsel %vm413, 0.0, %v482
        %v602 = vsel %vm413, 0.0, %v485
        %v603 = vsel %vm413, 0.0, %v488
        %v604 = vsel %vm413, 0.0, %v491
        %v605 = vsel %vm413, 0.0, %v494
        %v606 = vsel %vm413, 0.0, %v497
        %v607 = vsel %vm413, 0.0, %v500
        %v608 = vsel %vm413, 0.0, %v503
        %v609 = vsel %vm413, 0.0, %v506
        %v610 = vsel %vm413, 0.0, %v509
        %v611 = vlaneseq
        %v612 = vshrl.u32 %v611, 7
        %v613 = vsub.s32 0, %v612
        %v614 = vrot.slane %v346, %v613
        %v615 = vmul.f32 %v578, %v614
        %v616 = vmul.f32 %v415, %v614
        %v617 = vmul.f32 %v579, %v614
        %v618 = vmul.f32 %v418, %v614
        %v619 = vmul.f32 %v580, %v614
        %v620 = vmul.f32 %v421, %v614
        %v621 = vmul.f32 %v581, %v614
        %v622 = vmul.f32 %v424, %v614
        %v623 = vmul.f32 %v582, %v614
        %v624 = vmul.f32 %v427, %v614
        %v625 = vmul.f32 %v583, %v614
        %v626 = vmul.f32 %v430, %v614
        %v627 = vmul.f32 %v584, %v614
        %v628 = vmul.f32 %v433, %v614
        %v629 = vmul.f32 %v585, %v614
        %v630 = vmul.f32 %v436, %v614
        %v631 = vmul.f32 %v586, %v614
        %v632 = vmul.f32 %v439, %v614
        %v633 = vmul.f32 %v587, %v614
        %v634 = vmul.f32 %v442, %v614
        %v635 = vmul.f32 %v588, %v614
        %v636 = vmul.f32 %v445, %v614
        %v637 = vmul.f32 %v589, %v614
        %v638 = vmul.f32 %v448, %v614
        %v639 = vmul.f32 %v590, %v614
        %v640 = vmul.f32 %v451, %v614
        %v641 = vmul.f32 %v591, %v614
        %v642 = vmul.f32 %v454, %v614
        %v643 = vmul.f32 %v592, %v614
        %v644 = vmul.f32 %v457, %v614
        %v645 = vmul.f32 %v593, %v614
        %v646 = vmul.f32 %v460, %v614
        %v647 = vmul.f32 %v595, %v614
        %v648 = vmul.f32 %v466, %v614
        %v649 = vmul.f32 %v596, %v614
        %v650 = vmul.f32 %v469, %v614
        %v651 = vmul.f32 %v597, %v614
        %v652 = vmul.f32 %v472, %v614
        %v653 = vmul.f32 %v598, %v614
        %v654 = vmul.f32 %v475, %v614
        %v655 = vmul.f32 %v599, %v614
        %v656 = vmul.f32 %v478, %v614
        %v657 = vmul.f32 %v600, %v614
        %v658 = vmul.f32 %v481, %v614
        %v659 = vmul.f32 %v601, %v614
        %v660 = vmul.f32 %v484, %v614
        %v661 = vmul.f32 %v602, %v614
        %v662 = vmul.f32 %v487, %v614
        %v663 = vmul.f32 %v603, %v614
        %v664 = vmul.f32 %v490, %v614
        %v665 = vmul.f32 %v604, %v614
        %v666 = vmul.f32 %v493, %v614
        %v667 = vmul.f32 %v605, %v614
        %v668 = vmul.f32 %v496, %v614
        %v669 = vmul.f32 %v606, %v614
        %v670 = vmul.f32 %v499, %v614
        %v671 = vmul.f32 %v607, %v614
        %v672 = vmul.f32 %v502, %v614
        %v673 = vmul.f32 %v608, %v614
        %v674 = vmul.f32 %v505, %v614
        %v675 = vmul.f32 %v609, %v614
        %v676 = vmul.f32 %v508, %v614
        %v677 = vadd.f32 %v615, 0.0
        %v678 = vadd.f32 %v616, 0.0
        %v679 = vadd.f32 %v617, 0.0
        %v680 = vadd.f32 %v618, 0.0
        %v681 = vadd.f32 %v619, 0.0
        %v682 = vadd.f32 %v620, 0.0
        %v683 = vadd.f32 %v621, 0.0
        %v684 = vadd.f32 %v622, 0.0
        %v685 = vadd.f32 %v623, 0.0
        %v686 = vadd.f32 %v624, 0.0
        %v687 = vadd.f32 %v625, 0.0
        %v688 = vadd.f32 %v626, 0.0
        %v689 = vadd.f32 %v627, 0.0
        %v690 = vadd.f32 %v628, 0.0
        %v691 = vadd.f32 %v629, 0.0
        %v692 = vadd.f32 %v630, 0.0
        %v693 = vadd.f32 %v631, 0.0
        %v694 = vadd.f32 %v632, 0.0
        %v695 = vadd.f32 %v633, 0.0
        %v696 = vadd.f32 %v634, 0.0
        %v697 = vadd.f32 %v635, 0.0
        %v698 = vadd.f32 %v636, 0.0
        %v699 = vadd.f32 %v637, 0.0
        %v700 = vadd.f32 %v638, 0.0
        %v701 = vadd.f32 %v639, 0.0
        %v702 = vadd.f32 %v640, 0.0
        %v703 = vadd.f32 %v641, 0.0
        %v704 = vadd.f32 %v642, 0.0
        %v705 = vadd.f32 %v643, 0.0
        %v706 = vadd.f32 %v644, 0.0
        %v707 = vadd.f32 %v645, 0.0
        %v708 = vadd.f32 %v646, 0.0
        %v709 = vadd.f32 %v647, 0.0
        %v710 = vadd.f32 %v648, 0.0
        %v711 = vadd.f32 %v649, 0.0
        %v712 = vadd.f32 %v650, 0.0
        %v713 = vadd.f32 %v651, 0.0
        %v714 = vadd.f32 %v652, 0.0
        %v715 = vadd.f32 %v653, 0.0
        %v716 = vadd.f32 %v654, 0.0
        %v717 = vadd.f32 %v655, 0.0
        %v718 = vadd.f32 %v656, 0.0
        %v719 = vadd.f32 %v657, 0.0
        %v720 = vadd.f32 %v658, 0.0
        %v721 = vadd.f32 %v659, 0.0
        %v722 = vadd.f32 %v660, 0.0
        %v723 = vadd.f32 %v661, 0.0
        %v724 = vadd.f32 %v662, 0.0
        %v725 = vadd.f32 %v663, 0.0
        %v726 = vadd.f32 %v664, 0.0
        %v727 = vadd.f32 %v665, 0.0
        %v728 = vadd.f32 %v666, 0.0
        %v729 = vadd.f32 %v667, 0.0
        %v730 = vadd.f32 %v668, 0.0
        %v731 = vadd.f32 %v669, 0.0
        %v732 = vadd.f32 %v670, 0.0
        %v733 = vadd.f32 %v671, 0.0
        %v734 = vadd.f32 %v672, 0.0
        %v735 = vadd.f32 %v673, 0.0
        %v736 = vadd.f32 %v674, 0.0
        %v737 = vadd.f32 %v675, 0.0
        %v738 = vadd.f32 %v676, 0.0
        %v739 = vlaneseq
        %v740 = vshrl.u32 %v739, 7
        %v741 = vsub.s32 3, %v740
        %v742 = vrot.slane %v346, %v741
        %v743 = vmul.f32 %v579, %v742
        %v744 = vmul.f32 %v418, %v742
        %v745 = vmul.f32 %v580, %v742
        %v746 = vmul.f32 %v421, %v742
        %v747 = vmul.f32 %v581, %v742
        %v748 = vmul.f32 %v424, %v742
        %v749 = vmul.f32 %v582, %v742
        %v750 = vmul.f32 %v427, %v742
        %v751 = vmul.f32 %v583, %v742
        %v752 = vmul.f32 %v430, %v742
        %v753 = vmul.f32 %v584, %v742
        %v754 = vmul.f32 %v433, %v742
        %v755 = vmul.f32 %v585, %v742
        %v756 = vmul.f32 %v436, %v742
        %v757 = vmul.f32 %v586, %v742
        %v758 = vmul.f32 %v439, %v742
        %v759 = vmul.f32 %v587, %v742
        %v760 = vmul.f32 %v442, %v742
        %v761 = vmul.f32 %v588, %v742
        %v762 = vmul.f32 %v445, %v742
        %v763 = vmul.f32 %v589, %v742
        %v764 = vmul.f32 %v448, %v742
        %v765 = vmul.f32 %v590, %v742
        %v766 = vmul.f32 %v451, %v742
        %v767 = vmul.f32 %v591, %v742
        %v768 = vmul.f32 %v454, %v742
        %v769 = vmul.f32 %v592, %v742
        %v770 = vmul.f32 %v457, %v742
        %v771 = vmul.f32 %v593, %v742
        %v772 = vmul.f32 %v460, %v742
        %v773 = vmul.f32 %v594, %v742
        %v774 = vmul.f32 %v463, %v742
        %v775 = vmul.f32 %v595, %v742
        %v776 = vmul.f32 %v466, %v742
        %v777 = vmul.f32 %v596, %v742
        %v778 = vmul.f32 %v469, %v742
        %v779 = vmul.f32 %v597, %v742
        %v780 = vmul.f32 %v472, %v742
        %v781 = vmul.f32 %v598, %v742
        %v782 = vmul.f32 %v475, %v742
        %v783 = vmul.f32 %v599, %v742
        %v784 = vmul.f32 %v478, %v742
        %v785 = vmul.f32 %v600, %v742
        %v786 = vmul.f32 %v481, %v742
        %v787 = vmul.f32 %v601, %v742
        %v788 = vmul.f32 %v484, %v742
        %v789 = vmul.f32 %v602, %v742
        %v790 = vmul.f32 %v487, %v742
        %v791 = vmul.f32 %v603, %v742
        %v792 = vmul.f32 %v490, %v742
        %v793 = vmul.f32 %v604, %v742
        %v794 = vmul.f32 %v493, %v742
        %v795 = vmul.f32 %v605, %v742
        %v796 = vmul.f32 %v496, %v742
        %v797 = vmul.f32 %v606, %v742
        %v798 = vmul.f32 %v499, %v742
        %v799 = vmul.f32 %v607, %v742
        %v800 = vmul.f32 %v502, %v742
        %v801 = vmul.f32 %v608, %v742
        %v802 = vmul.f32 %v505, %v742
        %v803 = vmul.f32 %v609, %v742
        %v804 = vmul.f32 %v508, %v742
        %v805 = vmul.f32 %v610, %v742
        %v806 = vmul.f32 %v511, %v742
        %v807 = vadd.f32 %v677, %v743
        %v808 = vadd.f32 %v678, %v744
        %v809 = vadd.f32 %v679, %v745
        %v810 = vadd.f32 %v680, %v746
        %v811 = vadd.f32 %v681, %v747
        %v812 = vadd.f32 %v682, %v748
        %v813 = vadd.f32 %v683, %v749
        %v814 = vadd.f32 %v684, %v750
        %v815 = vadd.f32 %v685, %v751
        %v816 = vadd.f32 %v686, %v752
        %v817 = vadd.f32 %v687, %v753
        %v818 = vadd.f32 %v688, %v754
        %v819 = vadd.f32 %v689, %v755
        %v820 = vadd.f32 %v690, %v756
        %v821 = vadd.f32 %v691, %v757
        %v822 = vadd.f32 %v692, %v758
        %v823 = vadd.f32 %v693, %v759
        %v824 = vadd.f32 %v694, %v760
        %v825 = vadd.f32 %v695, %v761
        %v826 = vadd.f32 %v696, %v762
        %v827 = vadd.f32 %v697, %v763
        %v828 = vadd.f32 %v698, %v764
        %v829 = vadd.f32 %v699, %v765
        %v830 = vadd.f32 %v700, %v766
        %v831 = vadd.f32 %v701, %v767
        %v832 = vadd.f32 %v702, %v768
        %v833 = vadd.f32 %v703, %v769
        %v834 = vadd.f32 %v704, %v770
        %v835 = vadd.f32 %v705, %v771
        %v836 = vadd.f32 %v706, %v772
        %v837 = vadd.f32 %v707, %v773
        %v838 = vadd.f32 %v708, %v774
        %v839 = vadd.f32 %v677, %v775
        %v840 = vadd.f32 %v678, %v776
        %v841 = vadd.f32 %v709, %v777
        %v842 = vadd.f32 %v710, %v778
        %v843 = vadd.f32 %v711, %v779
        %v844 = vadd.f32 %v712, %v780
        %v845 = vadd.f32 %v713, %v781
        %v846 = vadd.f32 %v714, %v782
        %v847 = vadd.f32 %v715, %v783
        %v848 = vadd.f32 %v716, %v784
        %v849 = vadd.f32 %v717, %v785
        %v850 = vadd.f32 %v718, %v786
        %v851 = vadd.f32 %v719, %v787
        %v852 = vadd.f32 %v720, %v788
        %v853 = vadd.f32 %v721, %v789
        %v854 = vadd.f32 %v722, %v790
        %v855 = vadd.f32 %v723, %v791
        %v856 = vadd.f32 %v724, %v792
        %v857 = vadd.f32 %v725, %v793
        %v858 = vadd.f32 %v726, %v794
        %v859 = vadd.f32 %v727, %v795
        %v860 = vadd.f32 %v728, %v796
        %v861 = vadd.f32 %v729, %v797
        %v862 = vadd.f32 %v730, %v798
        %v863 = vadd.f32 %v731, %v799
        %v864 = vadd.f32 %v732, %v800
        %v865 = vadd.f32 %v733, %v801
        %v866 = vadd.f32 %v734, %v802
        %v867 = vadd.f32 %v735, %v803
        %v868 = vadd.f32 %v736, %v804
        %v869 = vadd.f32 %v737, %v805
        %v870 = vadd.f32 %v738, %v806
        %v871 = vlaneseq
        %v872 = vshrl.u32 %v871, 7
        %v873 = vsub.s32 6, %v872
        %v874 = vrot.slane %v346, %v873
        %v875 = vmul.f32 %v580, %v874
        %v876 = vmul.f32 %v421, %v874
        %v877 = vmul.f32 %v581, %v874
        %v878 = vmul.f32 %v424, %v874
        %v879 = vmul.f32 %v582, %v874
        %v880 = vmul.f32 %v427, %v874
        %v881 = vmul.f32 %v583, %v874
        %v882 = vmul.f32 %v430, %v874
        %v883 = vmul.f32 %v584, %v874
        %v884 = vmul.f32 %v433, %v874
        %v885 = vmul.f32 %v585, %v874
        %v886 = vmul.f32 %v436, %v874
        %v887 = vmul.f32 %v586, %v874
        %v888 = vmul.f32 %v439, %v874
        %v889 = vmul.f32 %v587, %v874
        %v890 = vmul.f32 %v442, %v874
        %v891 = vmul.f32 %v588, %v874
        %v892 = vmul.f32 %v445, %v874
        %v893 = vmul.f32 %v589, %v874
        %v894 = vmul.f32 %v448, %v874
        %v895 = vmul.f32 %v590, %v874
        %v896 = vmul.f32 %v451, %v874
        %v897 = vmul.f32 %v591, %v874
        %v898 = vmul.f32 %v454, %v874
        %v899 = vmul.f32 %v592, %v874
        %v900 = vmul.f32 %v457, %v874
        %v901 = vmul.f32 %v593, %v874
        %v902 = vmul.f32 %v460, %v874
        %v903 = vmul.f32 %v594, %v874
        %v904 = vmul.f32 %v463, %v874
        %v905 = vmul.f32 %v578, %v874
        %v906 = vmul.f32 %v415, %v874
        %v907 = vmul.f32 %v596, %v874
        %v908 = vmul.f32 %v469, %v874
        %v909 = vmul.f32 %v597, %v874
        %v910 = vmul.f32 %v472, %v874
        %v911 = vmul.f32 %v598, %v874
        %v912 = vmul.f32 %v475, %v874
        %v913 = vmul.f32 %v599, %v874
        %v914 = vmul.f32 %v478, %v874
        %v915 = vmul.f32 %v600, %v874
        %v916 = vmul.f32 %v481, %v874
        %v917 = vmul.f32 %v601, %v874
        %v918 = vmul.f32 %v484, %v874
        %v919 = vmul.f32 %v602, %v874
        %v920 = vmul.f32 %v487, %v874
        %v921 = vmul.f32 %v603, %v874
        %v922 = vmul.f32 %v490, %v874
        %v923 = vmul.f32 %v604, %v874
        %v924 = vmul.f32 %v493, %v874
        %v925 = vmul.f32 %v605, %v874
        %v926 = vmul.f32 %v496, %v874
        %v927 = vmul.f32 %v606, %v874
        %v928 = vmul.f32 %v499, %v874
        %v929 = vmul.f32 %v607, %v874
        %v930 = vmul.f32 %v502, %v874
        %v931 = vmul.f32 %v608, %v874
        %v932 = vmul.f32 %v505, %v874
        %v933 = vmul.f32 %v609, %v874
        %v934 = vmul.f32 %v508, %v874
        %v935 = vmul.f32 %v610, %v874
        %v936 = vmul.f32 %v511, %v874
        %v937 = vadd.f32 %v807, %v875
        %v938 = vadd.f32 %v808, %v876
        %v939 = vadd.f32 %v809, %v877
        %v940 = vadd.f32 %v810, %v878
        %v941 = vadd.f32 %v811, %v879
        %v942 = vadd.f32 %v812, %v880
        %v943 = vadd.f32 %v813, %v881
        %v944 = vadd.f32 %v814, %v882
        %v945 = vadd.f32 %v815, %v883
        %v946 = vadd.f32 %v816, %v884
        %v947 = vadd.f32 %v817, %v885
        %v948 = vadd.f32 %v818, %v886
        %v949 = vadd.f32 %v819, %v887
        %v950 = vadd.f32 %v820, %v888
        %v951 = vadd.f32 %v821, %v889
        %v952 = vadd.f32 %v822, %v890
        %v953 = vadd.f32 %v823, %v891
        %v954 = vadd.f32 %v824, %v892
        %v955 = vadd.f32 %v825, %v893
        %v956 = vadd.f32 %v826, %v894
        %v957 = vadd.f32 %v827, %v895
        %v958 = vadd.f32 %v828, %v896
        %v959 = vadd.f32 %v829, %v897
        %v960 = vadd.f32 %v830, %v898
        %v961 = vadd.f32 %v831, %v899
        %v962 = vadd.f32 %v832, %v900
        %v963 = vadd.f32 %v833, %v901
        %v964 = vadd.f32 %v834, %v902
        %v965 = vadd.f32 %v835, %v903
        %v966 = vadd.f32 %v836, %v904
        %v967 = vadd.f32 %v837, %v905
        %v968 = vadd.f32 %v838, %v906
        %v969 = vadd.f32 %v839, %v907
        %v970 = vadd.f32 %v840, %v908
        %v971 = vadd.f32 %v841, %v909
        %v972 = vadd.f32 %v842, %v910
        %v973 = vadd.f32 %v843, %v911
        %v974 = vadd.f32 %v844, %v912
        %v975 = vadd.f32 %v845, %v913
        %v976 = vadd.f32 %v846, %v914
        %v977 = vadd.f32 %v847, %v915
        %v978 = vadd.f32 %v848, %v916
        %v979 = vadd.f32 %v849, %v917
        %v980 = vadd.f32 %v850, %v918
        %v981 = vadd.f32 %v851, %v919
        %v982 = vadd.f32 %v852, %v920
        %v983 = vadd.f32 %v853, %v921
        %v984 = vadd.f32 %v854, %v922
        %v985 = vadd.f32 %v855, %v923
        %v986 = vadd.f32 %v856, %v924
        %v987 = vadd.f32 %v857, %v925
        %v988 = vadd.f32 %v858, %v926
        %v989 = vadd.f32 %v859, %v927
        %v990 = vadd.f32 %v860, %v928
        %v991 = vadd.f32 %v861, %v929
        %v992 = vadd.f32 %v862, %v930
        %v993 = vadd.f32 %v863, %v931
        %v994 = vadd.f32 %v864, %v932
        %v995 = vadd.f32 %v865, %v933
        %v996 = vadd.f32 %v866, %v934
        %v997 = vadd.f32 %v867, %v935
        %v998 = vadd.f32 %v868, %v936
        %v999 = vadd.f32 %v869, %v905
        %v1000 = vadd.f32 %v870, %v906
        %v1001 = vlaneseq
        %v1002 = vshrl.u32 %v1001, 7
        %v1003 = vsub.s32 1, %v1002
        %v1004 = vrot.slane %v346, %v1003
        %v1005 = vmul.f32 %v1004, 0.0
        %v1006 = vmul.f32 %v282, %v1004
        %v1007 = vmul.f32 %v283, %v1004
        %v1008 = vmul.f32 %v284, %v1004
        %v1009 = vmul.f32 %v285, %v1004
        %v1010 = vmul.f32 %v286, %v1004
        %v1011 = vmul.f32 %v287, %v1004
        %v1012 = vmul.f32 %v288, %v1004
        %v1013 = vmul.f32 %v289, %v1004
        %v1014 = vmul.f32 %v290, %v1004
        %v1015 = vmul.f32 %v291, %v1004
        %v1016 = vmul.f32 %v292, %v1004
        %v1017 = vmul.f32 %v293, %v1004
        %v1018 = vmul.f32 %v294, %v1004
        %v1019 = vmul.f32 %v295, %v1004
        %v1020 = vmul.f32 %v296, %v1004
        %v1021 = vmul.f32 %v297, %v1004
        %v1022 = vmul.f32 %v298, %v1004
        %v1023 = vmul.f32 %v299, %v1004
        %v1024 = vmul.f32 %v300, %v1004
        %v1025 = vmul.f32 %v301, %v1004
        %v1026 = vmul.f32 %v302, %v1004
        %v1027 = vmul.f32 %v303, %v1004
        %v1028 = vmul.f32 %v304, %v1004
        %v1029 = vmul.f32 %v305, %v1004
        %v1030 = vmul.f32 %v306, %v1004
        %v1031 = vmul.f32 %v307, %v1004
        %v1032 = vmul.f32 %v308, %v1004
        %v1033 = vmul.f32 %v309, %v1004
        %v1034 = vmul.f32 %v310, %v1004
        %v1035 = vmul.f32 %v311, %v1004
        %v1036 = vmul.f32 %v314, %v1004
        %v1037 = vmul.f32 %v315, %v1004
        %v1038 = vmul.f32 %v316, %v1004
        %v1039 = vmul.f32 %v317, %v1004
        %v1040 = vmul.f32 %v318, %v1004
        %v1041 = vmul.f32 %v319, %v1004
        %v1042 = vmul.f32 %v320, %v1004
        %v1043 = vmul.f32 %v321, %v1004
        %v1044 = vmul.f32 %v322, %v1004
        %v1045 = vmul.f32 %v323, %v1004
        %v1046 = vmul.f32 %v324, %v1004
        %v1047 = vmul.f32 %v325, %v1004
        %v1048 = vmul.f32 %v326, %v1004
        %v1049 = vmul.f32 %v327, %v1004
        %v1050 = vmul.f32 %v328, %v1004
        %v1051 = vmul.f32 %v329, %v1004
        %v1052 = vmul.f32 %v330, %v1004
        %v1053 = vmul.f32 %v331, %v1004
        %v1054 = vmul.f32 %v332, %v1004
        %v1055 = vmul.f32 %v333, %v1004
        %v1056 = vmul.f32 %v334, %v1004
        %v1057 = vmul.f32 %v335, %v1004
        %v1058 = vmul.f32 %v336, %v1004
        %v1059 = vmul.f32 %v337, %v1004
        %v1060 = vmul.f32 %v338, %v1004
        %v1061 = vmul.f32 %v339, %v1004
        %v1062 = vmul.f32 %v340, %v1004
        %v1063 = vmul.f32 %v341, %v1004
        %v1064 = vmul.f32 %v342, %v1004
        %v1065 = vmul.f32 %v343, %v1004
        %v1066 = vadd.f32 %v937, %v1005
        %v1067 = vadd.f32 %v938, %v1005
        %v1068 = vadd.f32 %v939, %v1006
        %v1069 = vadd.f32 %v940, %v1007
        %v1070 = vadd.f32 %v941, %v1008
        %v1071 = vadd.f32 %v942, %v1009
        %v1072 = vadd.f32 %v943, %v1010
        %v1073 = vadd.f32 %v944, %v1011
        %v1074 = vadd.f32 %v945, %v1012
        %v1075 = vadd.f32 %v946, %v1013
        %v1076 = vadd.f32 %v947, %v1014
        %v1077 = vadd.f32 %v948, %v1015
        %v1078 = vadd.f32 %v949, %v1016
        %v1079 = vadd.f32 %v950, %v1017
        %v1080 = vadd.f32 %v951, %v1018
        %v1081 = vadd.f32 %v952, %v1019
        %v1082 = vadd.f32 %v953, %v1020
        %v1083 = vadd.f32 %v954, %v1021
        %v1084 = vadd.f32 %v955, %v1022
        %v1085 = vadd.f32 %v956, %v1023
        %v1086 = vadd.f32 %v957, %v1024
        %v1087 = vadd.f32 %v958, %v1025
        %v1088 = vadd.f32 %v959, %v1026
        %v1089 = vadd.f32 %v960, %v1027
        %v1090 = vadd.f32 %v961, %v1028
        %v1091 = vadd.f32 %v962, %v1029
        %v1092 = vadd.f32 %v963, %v1030
        %v1093 = vadd.f32 %v964, %v1031
        %v1094 = vadd.f32 %v965, %v1032
        %v1095 = vadd.f32 %v966, %v1033
        %v1096 = vadd.f32 %v967, %v1034
        %v1097 = vadd.f32 %v968, %v1035
        %v1098 = vadd.f32 %v969, %v1005
        %v1099 = vadd.f32 %v970, %v1005
        %v1100 = vadd.f32 %v971, %v1036
        %v1101 = vadd.f32 %v972, %v1037
        %v1102 = vadd.f32 %v973, %v1038
        %v1103 = vadd.f32 %v974, %v1039
        %v1104 = vadd.f32 %v975, %v1040
        %v1105 = vadd.f32 %v976, %v1041
        %v1106 = vadd.f32 %v977, %v1042
        %v1107 = vadd.f32 %v978, %v1043
        %v1108 = vadd.f32 %v979, %v1044
        %v1109 = vadd.f32 %v980, %v1045
        %v1110 = vadd.f32 %v981, %v1046
        %v1111 = vadd.f32 %v982, %v1047
        %v1112 = vadd.f32 %v983, %v1048
        %v1113 = vadd.f32 %v984, %v1049
        %v1114 = vadd.f32 %v985, %v1050
        %v1115 = vadd.f32 %v986, %v1051
        %v1116 = vadd.f32 %v987, %v1052
        %v1117 = vadd.f32 %v988, %v1053
        %v1118 = vadd.f32 %v989, %v1054
        %v1119 = vadd.f32 %v990, %v1055
        %v1120 = vadd.f32 %v991, %v1056
        %v1121 = vadd.f32 %v992, %v1057
        %v1122 = vadd.f32 %v993, %v1058
        %v1123 = vadd.f32 %v994, %v1059
        %v1124 = vadd.f32 %v995, %v1060
        %v1125 = vadd.f32 %v996, %v1061
        %v1126 = vadd.f32 %v997, %v1062
        %v1127 = vadd.f32 %v998, %v1063
        %v1128 = vadd.f32 %v999, %v1064
        %v1129 = vadd.f32 %v1000, %v1065
        %v1130 = vlaneseq
        %v1131 = vshrl.u32 %v1130, 7
        %v1132 = vsub.s32 4, %v1131
        %v1133 = vrot.slane %v346, %v1132
        %v1134 = vmul.f32 %v282, %v1133
        %v1135 = vmul.f32 %v283, %v1133
        %v1136 = vmul.f32 %v284, %v1133
        %v1137 = vmul.f32 %v285, %v1133
        %v1138 = vmul.f32 %v286, %v1133
        %v1139 = vmul.f32 %v287, %v1133
        %v1140 = vmul.f32 %v288, %v1133
        %v1141 = vmul.f32 %v289, %v1133
        %v1142 = vmul.f32 %v290, %v1133
        %v1143 = vmul.f32 %v291, %v1133
        %v1144 = vmul.f32 %v292, %v1133
        %v1145 = vmul.f32 %v293, %v1133
        %v1146 = vmul.f32 %v294, %v1133
        %v1147 = vmul.f32 %v295, %v1133
        %v1148 = vmul.f32 %v296, %v1133
        %v1149 = vmul.f32 %v297, %v1133
        %v1150 = vmul.f32 %v298, %v1133
        %v1151 = vmul.f32 %v299, %v1133
        %v1152 = vmul.f32 %v300, %v1133
        %v1153 = vmul.f32 %v301, %v1133
        %v1154 = vmul.f32 %v302, %v1133
        %v1155 = vmul.f32 %v303, %v1133
        %v1156 = vmul.f32 %v304, %v1133
        %v1157 = vmul.f32 %v305, %v1133
        %v1158 = vmul.f32 %v306, %v1133
        %v1159 = vmul.f32 %v307, %v1133
        %v1160 = vmul.f32 %v308, %v1133
        %v1161 = vmul.f32 %v309, %v1133
        %v1162 = vmul.f32 %v310, %v1133
        %v1163 = vmul.f32 %v311, %v1133
        %v1164 = vmul.f32 %v312, %v1133
        %v1165 = vmul.f32 %v313, %v1133
        %v1166 = vmul.f32 %v314, %v1133
        %v1167 = vmul.f32 %v315, %v1133
        %v1168 = vmul.f32 %v316, %v1133
        %v1169 = vmul.f32 %v317, %v1133
        %v1170 = vmul.f32 %v318, %v1133
        %v1171 = vmul.f32 %v319, %v1133
        %v1172 = vmul.f32 %v320, %v1133
        %v1173 = vmul.f32 %v321, %v1133
        %v1174 = vmul.f32 %v322, %v1133
        %v1175 = vmul.f32 %v323, %v1133
        %v1176 = vmul.f32 %v324, %v1133
        %v1177 = vmul.f32 %v325, %v1133
        %v1178 = vmul.f32 %v326, %v1133
        %v1179 = vmul.f32 %v327, %v1133
        %v1180 = vmul.f32 %v328, %v1133
        %v1181 = vmul.f32 %v329, %v1133
        %v1182 = vmul.f32 %v330, %v1133
        %v1183 = vmul.f32 %v331, %v1133
        %v1184 = vmul.f32 %v332, %v1133
        %v1185 = vmul.f32 %v333, %v1133
        %v1186 = vmul.f32 %v334, %v1133
        %v1187 = vmul.f32 %v335, %v1133
        %v1188 = vmul.f32 %v336, %v1133
        %v1189 = vmul.f32 %v337, %v1133
        %v1190 = vmul.f32 %v338, %v1133
        %v1191 = vmul.f32 %v339, %v1133
        %v1192 = vmul.f32 %v340, %v1133
        %v1193 = vmul.f32 %v341, %v1133
        %v1194 = vmul.f32 %v342, %v1133
        %v1195 = vmul.f32 %v343, %v1133
        %v1196 = vmul.f32 %v344, %v1133
        %v1197 = vmul.f32 %v345, %v1133
        %v1198 = vadd.f32 %v1066, %v1134
        %v1199 = vadd.f32 %v1067, %v1135
        %v1200 = vadd.f32 %v1068, %v1136
        %v1201 = vadd.f32 %v1069, %v1137
        %v1202 = vadd.f32 %v1070, %v1138
        %v1203 = vadd.f32 %v1071, %v1139
        %v1204 = vadd.f32 %v1072, %v1140
        %v1205 = vadd.f32 %v1073, %v1141
        %v1206 = vadd.f32 %v1074, %v1142
        %v1207 = vadd.f32 %v1075, %v1143
        %v1208 = vadd.f32 %v1076, %v1144
        %v1209 = vadd.f32 %v1077, %v1145
        %v1210 = vadd.f32 %v1078, %v1146
        %v1211 = vadd.f32 %v1079, %v1147
        %v1212 = vadd.f32 %v1080, %v1148
        %v1213 = vadd.f32 %v1081, %v1149
        %v1214 = vadd.f32 %v1082, %v1150
        %v1215 = vadd.f32 %v1083, %v1151
        %v1216 = vadd.f32 %v1084, %v1152
        %v1217 = vadd.f32 %v1085, %v1153
        %v1218 = vadd.f32 %v1086, %v1154
        %v1219 = vadd.f32 %v1087, %v1155
        %v1220 = vadd.f32 %v1088, %v1156
        %v1221 = vadd.f32 %v1089, %v1157
        %v1222 = vadd.f32 %v1090, %v1158
        %v1223 = vadd.f32 %v1091, %v1159
        %v1224 = vadd.f32 %v1092, %v1160
        %v1225 = vadd.f32 %v1093, %v1161
        %v1226 = vadd.f32 %v1094, %v1162
        %v1227 = vadd.f32 %v1095, %v1163
        %v1228 = vadd.f32 %v1096, %v1164
        %v1229 = vadd.f32 %v1097, %v1165
        %v1230 = vadd.f32 %v1098, %v1166
        %v1231 = vadd.f32 %v1099, %v1167
        %v1232 = vadd.f32 %v1100, %v1168
        %v1233 = vadd.f32 %v1101, %v1169
        %v1234 = vadd.f32 %v1102, %v1170
        %v1235 = vadd.f32 %v1103, %v1171
        %v1236 = vadd.f32 %v1104, %v1172
        %v1237 = vadd.f32 %v1105, %v1173
        %v1238 = vadd.f32 %v1106, %v1174
        %v1239 = vadd.f32 %v1107, %v1175
        %v1240 = vadd.f32 %v1108, %v1176
        %v1241 = vadd.f32 %v1109, %v1177
        %v1242 = vadd.f32 %v1110, %v1178
        %v1243 = vadd.f32 %v1111, %v1179
        %v1244 = vadd.f32 %v1112, %v1180
        %v1245 = vadd.f32 %v1113, %v1181
        %v1246 = vadd.f32 %v1114, %v1182
        %v1247 = vadd.f32 %v1115, %v1183
        %v1248 = vadd.f32 %v1116, %v1184
        %v1249 = vadd.f32 %v1117, %v1185
        %v1250 = vadd.f32 %v1118, %v1186
        %v1251 = vadd.f32 %v1119, %v1187
        %v1252 = vadd.f32 %v1120, %v1188
        %v1253 = vadd.f32 %v1121, %v1189
        %v1254 = vadd.f32 %v1122, %v1190
        %v1255 = vadd.f32 %v1123, %v1191
        %v1256 = vadd.f32 %v1124, %v1192
        %v1257 = vadd.f32 %v1125, %v1193
        %v1258 = vadd.f32 %v1126, %v1194
        %v1259 = vadd.f32 %v1127, %v1195
        %v1260 = vadd.f32 %v1128, %v1196
        %v1261 = vadd.f32 %v1129, %v1197
        %v1262 = vlaneseq
        %v1263 = vshrl.u32 %v1262, 7
        %v1264 = vsub.s32 7, %v1263
        %v1265 = vrot.slane %v346, %v1264
        %v1266 = vmul.f32 %v284, %v1265
        %v1267 = vmul.f32 %v285, %v1265
        %v1268 = vmul.f32 %v286, %v1265
        %v1269 = vmul.f32 %v287, %v1265
        %v1270 = vmul.f32 %v288, %v1265
        %v1271 = vmul.f32 %v289, %v1265
        %v1272 = vmul.f32 %v290, %v1265
        %v1273 = vmul.f32 %v291, %v1265
        %v1274 = vmul.f32 %v292, %v1265
        %v1275 = vmul.f32 %v293, %v1265
        %v1276 = vmul.f32 %v294, %v1265
        %v1277 = vmul.f32 %v295, %v1265
        %v1278 = vmul.f32 %v296, %v1265
        %v1279 = vmul.f32 %v297, %v1265
        %v1280 = vmul.f32 %v298, %v1265
        %v1281 = vmul.f32 %v299, %v1265
        %v1282 = vmul.f32 %v300, %v1265
        %v1283 = vmul.f32 %v301, %v1265
        %v1284 = vmul.f32 %v302, %v1265
        %v1285 = vmul.f32 %v303, %v1265
        %v1286 = vmul.f32 %v304, %v1265
        %v1287 = vmul.f32 %v305, %v1265
        %v1288 = vmul.f32 %v306, %v1265
        %v1289 = vmul.f32 %v307, %v1265
        %v1290 = vmul.f32 %v308, %v1265
        %v1291 = vmul.f32 %v309, %v1265
        %v1292 = vmul.f32 %v310, %v1265
        %v1293 = vmul.f32 %v311, %v1265
        %v1294 = vmul.f32 %v312, %v1265
        %v1295 = vmul.f32 %v313, %v1265
        %v1296 = vmul.f32 %v1265, 0.0
        %v1297 = vmul.f32 %v316, %v1265
        %v1298 = vmul.f32 %v317, %v1265
        %v1299 = vmul.f32 %v318, %v1265
        %v1300 = vmul.f32 %v319, %v1265
        %v1301 = vmul.f32 %v320, %v1265
        %v1302 = vmul.f32 %v321, %v1265
        %v1303 = vmul.f32 %v322, %v1265
        %v1304 = vmul.f32 %v323, %v1265
        %v1305 = vmul.f32 %v324, %v1265
        %v1306 = vmul.f32 %v325, %v1265
        %v1307 = vmul.f32 %v326, %v1265
        %v1308 = vmul.f32 %v327, %v1265
        %v1309 = vmul.f32 %v328, %v1265
        %v1310 = vmul.f32 %v329, %v1265
        %v1311 = vmul.f32 %v330, %v1265
        %v1312 = vmul.f32 %v331, %v1265
        %v1313 = vmul.f32 %v332, %v1265
        %v1314 = vmul.f32 %v333, %v1265
        %v1315 = vmul.f32 %v334, %v1265
        %v1316 = vmul.f32 %v335, %v1265
        %v1317 = vmul.f32 %v336, %v1265
        %v1318 = vmul.f32 %v337, %v1265
        %v1319 = vmul.f32 %v338, %v1265
        %v1320 = vmul.f32 %v339, %v1265
        %v1321 = vmul.f32 %v340, %v1265
        %v1322 = vmul.f32 %v341, %v1265
        %v1323 = vmul.f32 %v342, %v1265
        %v1324 = vmul.f32 %v343, %v1265
        %v1325 = vmul.f32 %v344, %v1265
        %v1326 = vmul.f32 %v345, %v1265
        %v1327 = vadd.f32 %v1198, %v1266
        %v1328 = vadd.f32 %v1199, %v1267
        %v1329 = vadd.f32 %v1200, %v1268
        %v1330 = vadd.f32 %v1201, %v1269
        %v1331 = vadd.f32 %v1202, %v1270
        %v1332 = vadd.f32 %v1203, %v1271
        %v1333 = vadd.f32 %v1204, %v1272
        %v1334 = vadd.f32 %v1205, %v1273
        %v1335 = vadd.f32 %v1206, %v1274
        %v1336 = vadd.f32 %v1207, %v1275
        %v1337 = vadd.f32 %v1208, %v1276
        %v1338 = vadd.f32 %v1209, %v1277
        %v1339 = vadd.f32 %v1210, %v1278
        %v1340 = vadd.f32 %v1211, %v1279
        %v1341 = vadd.f32 %v1212, %v1280
        %v1342 = vadd.f32 %v1213, %v1281
        %v1343 = vadd.f32 %v1214, %v1282
        %v1344 = vadd.f32 %v1215, %v1283
        %v1345 = vadd.f32 %v1216, %v1284
        %v1346 = vadd.f32 %v1217, %v1285
        %v1347 = vadd.f32 %v1218, %v1286
        %v1348 = vadd.f32 %v1219, %v1287
        %v1349 = vadd.f32 %v1220, %v1288
        %v1350 = vadd.f32 %v1221, %v1289
        %v1351 = vadd.f32 %v1222, %v1290
        %v1352 = vadd.f32 %v1223, %v1291
        %v1353 = vadd.f32 %v1224, %v1292
        %v1354 = vadd.f32 %v1225, %v1293
        %v1355 = vadd.f32 %v1226, %v1294
        %v1356 = vadd.f32 %v1227, %v1295
        %v1357 = vadd.f32 %v1228, %v1296
        %v1358 = vadd.f32 %v1229, %v1296
        %v1359 = vadd.f32 %v1230, %v1297
        %v1360 = vadd.f32 %v1231, %v1298
        %v1361 = vadd.f32 %v1232, %v1299
        %v1362 = vadd.f32 %v1233, %v1300
        %v1363 = vadd.f32 %v1234, %v1301
        %v1364 = vadd.f32 %v1235, %v1302
        %v1365 = vadd.f32 %v1236, %v1303
        %v1366 = vadd.f32 %v1237, %v1304
        %v1367 = vadd.f32 %v1238, %v1305
        %v1368 = vadd.f32 %v1239, %v1306
        %v1369 = vadd.f32 %v1240, %v1307
        %v1370 = vadd.f32 %v1241, %v1308
        %v1371 = vadd.f32 %v1242, %v1309
        %v1372 = vadd.f32 %v1243, %v1310
        %v1373 = vadd.f32 %v1244, %v1311
        %v1374 = vadd.f32 %v1245, %v1312
        %v1375 = vadd.f32 %v1246, %v1313
        %v1376 = vadd.f32 %v1247, %v1314
        %v1377 = vadd.f32 %v1248, %v1315
        %v1378 = vadd.f32 %v1249, %v1316
        %v1379 = vadd.f32 %v1250, %v1317
        %v1380 = vadd.f32 %v1251, %v1318
        %v1381 = vadd.f32 %v1252, %v1319
        %v1382 = vadd.f32 %v1253, %v1320
        %v1383 = vadd.f32 %v1254, %v1321
        %v1384 = vadd.f32 %v1255, %v1322
        %v1385 = vadd.f32 %v1256, %v1323
        %v1386 = vadd.f32 %v1257, %v1324
        %v1387 = vadd.f32 %v1258, %v1325
        %v1388 = vadd.f32 %v1259, %v1326
        %v1389 = vadd.f32 %v1260, %v1296
        %v1390 = vadd.f32 %v1261, %v1296
        %vm1391 = vcmask 1046528
        %v1392 = vrot.slane 0.0, 1
        %v1393 = vsel %vm1391, %v1392, %v1392
        %v1394 = vrot.slane %v282, 1
        %v1395 = vrot.slane %v283, 1
        %v1396 = vsel %vm1391, %v1394, %v1395
        %v1397 = vrot.slane %v284, 1
        %v1398 = vrot.slane %v285, 1
        %v1399 = vsel %vm1391, %v1397, %v1398
        %v1400 = vrot.slane %v286, 1
        %v1401 = vrot.slane %v287, 1
        %v1402 = vsel %vm1391, %v1400, %v1401
        %v1403 = vrot.slane %v288, 1
        %v1404 = vrot.slane %v289, 1
        %v1405 = vsel %vm1391, %v1403, %v1404
        %v1406 = vrot.slane %v290, 1
        %v1407 = vrot.slane %v291, 1
        %v1408 = vsel %vm1391, %v1406, %v1407
        %v1409 = vrot.slane %v292, 1
        %v1410 = vrot.slane %v293, 1
        %v1411 = vsel %vm1391, %v1409, %v1410
        %v1412 = vrot.slane %v294, 1
        %v1413 = vrot.slane %v295, 1
        %v1414 = vsel %vm1391, %v1412, %v1413
        %v1415 = vrot.slane %v296, 1
        %v1416 = vrot.slane %v297, 1
        %v1417 = vsel %vm1391, %v1415, %v1416
        %v1418 = vrot.slane %v298, 1
        %v1419 = vrot.slane %v299, 1
        %v1420 = vsel %vm1391, %v1418, %v1419
        %v1421 = vrot.slane %v300, 1
        %v1422 = vrot.slane %v301, 1
        %v1423 = vsel %vm1391, %v1421, %v1422
        %v1424 = vrot.slane %v302, 1
        %v1425 = vrot.slane %v303, 1
        %v1426 = vsel %vm1391, %v1424, %v1425
        %v1427 = vrot.slane %v304, 1
        %v1428 = vrot.slane %v305, 1
        %v1429 = vsel %vm1391, %v1427, %v1428
        %v1430 = vrot.slane %v306, 1
        %v1431 = vrot.slane %v307, 1
        %v1432 = vsel %vm1391, %v1430, %v1431
        %v1433 = vrot.slane %v308, 1
        %v1434 = vrot.slane %v309, 1
        %v1435 = vsel %vm1391, %v1433, %v1434
        %v1436 = vrot.slane %v310, 1
        %v1437 = vrot.slane %v311, 1
        %v1438 = vsel %vm1391, %v1436, %v1437
        %v1439 = vrot.slane %v312, 1
        %v1440 = vrot.slane %v313, 1
        %v1441 = vsel %vm1391, %v1439, %v1440
        %v1442 = vrot.slane %v314, 1
        %v1443 = vrot.slane %v315, 1
        %v1444 = vsel %vm1391, %v1442, %v1443
        %v1445 = vrot.slane %v316, 1
        %v1446 = vrot.slane %v317, 1
        %v1447 = vsel %vm1391, %v1445, %v1446
        %v1448 = vrot.slane %v318, 1
        %v1449 = vrot.slane %v319, 1
        %v1450 = vsel %vm1391, %v1448, %v1449
        %v1451 = vrot.slane %v320, 1
        %v1452 = vrot.slane %v321, 1
        %v1453 = vsel %vm1391, %v1451, %v1452
        %v1454 = vrot.slane %v322, 1
        %v1455 = vrot.slane %v323, 1
        %v1456 = vsel %vm1391, %v1454, %v1455
        %v1457 = vrot.slane %v324, 1
        %v1458 = vrot.slane %v325, 1
        %v1459 = vsel %vm1391, %v1457, %v1458
        %v1460 = vrot.slane %v326, 1
        %v1461 = vrot.slane %v327, 1
        %v1462 = vsel %vm1391, %v1460, %v1461
        %v1463 = vrot.slane %v328, 1
        %v1464 = vrot.slane %v329, 1
        %v1465 = vsel %vm1391, %v1463, %v1464
        %v1466 = vrot.slane %v330, 1
        %v1467 = vrot.slane %v331, 1
        %v1468 = vsel %vm1391, %v1466, %v1467
        %v1469 = vrot.slane %v332, 1
        %v1470 = vrot.slane %v333, 1
        %v1471 = vsel %vm1391, %v1469, %v1470
        %v1472 = vrot.slane %v334, 1
        %v1473 = vrot.slane %v335, 1
        %v1474 = vsel %vm1391, %v1472, %v1473
        %v1475 = vrot.slane %v336, 1
        %v1476 = vrot.slane %v337, 1
        %v1477 = vsel %vm1391, %v1475, %v1476
        %v1478 = vrot.slane %v338, 1
        %v1479 = vrot.slane %v339, 1
        %v1480 = vsel %vm1391, %v1478, %v1479
        %v1481 = vrot.slane %v340, 1
        %v1482 = vrot.slane %v341, 1
        %v1483 = vsel %vm1391, %v1481, %v1482
        %v1484 = vrot.slane %v342, 1
        %v1485 = vrot.slane %v343, 1
        %v1486 = vsel %vm1391, %v1484, %v1485
        %v1487 = vrot.slane %v344, 1
        %v1488 = vrot.slane %v345, 1
        %v1489 = vsel %vm1391, %v1487, %v1488
        %v1556 = vsel %vm1391, %v1392, 0.0
        %v1557 = vsel %vm1391, %v1395, 0.0
        %v1558 = vsel %vm1391, %v1398, 0.0
        %v1559 = vsel %vm1391, %v1401, 0.0
        %v1560 = vsel %vm1391, %v1404, 0.0
        %v1561 = vsel %vm1391, %v1407, 0.0
        %v1562 = vsel %vm1391, %v1410, 0.0
        %v1563 = vsel %vm1391, %v1413, 0.0
        %v1564 = vsel %vm1391, %v1416, 0.0
        %v1565 = vsel %vm1391, %v1419, 0.0
        %v1566 = vsel %vm1391, %v1422, 0.0
        %v1567 = vsel %vm1391, %v1425, 0.0
        %v1568 = vsel %vm1391, %v1428, 0.0
        %v1569 = vsel %vm1391, %v1431, 0.0
        %v1570 = vsel %vm1391, %v1434, 0.0
        %v1571 = vsel %vm1391, %v1437, 0.0
        %v1572 = vsel %vm1391, %v1440, 0.0
        %v1573 = vsel %vm1391, %v1443, 0.0
        %v1574 = vsel %vm1391, %v1446, 0.0
        %v1575 = vsel %vm1391, %v1449, 0.0
        %v1576 = vsel %vm1391, %v1452, 0.0
        %v1577 = vsel %vm1391, %v1455, 0.0
        %v1578 = vsel %vm1391, %v1458, 0.0
        %v1579 = vsel %vm1391, %v1461, 0.0
        %v1580 = vsel %vm1391, %v1464, 0.0
        %v1581 = vsel %vm1391, %v1467, 0.0
        %v1582 = vsel %vm1391, %v1470, 0.0
        %v1583 = vsel %vm1391, %v1473, 0.0
        %v1584 = vsel %vm1391, %v1476, 0.0
        %v1585 = vsel %vm1391, %v1479, 0.0
        %v1586 = vsel %vm1391, %v1482, 0.0
        %v1587 = vsel %vm1391, %v1485, 0.0
        %v1588 = vsel %vm1391, %v1488, 0.0
        %v1589 = vlaneseq
        %v1590 = vshrl.u32 %v1589, 7
        %v1591 = vsub.s32 2, %v1590
        %v1592 = vrot.slane %v346, %v1591
        %v1593 = vmul.f32 %v1393, %v1592
        %v1594 = vmul.f32 %v1556, %v1592
        %v1595 = vmul.f32 %v1396, %v1592
        %v1596 = vmul.f32 %v1557, %v1592
        %v1597 = vmul.f32 %v1399, %v1592
        %v1598 = vmul.f32 %v1558, %v1592
        %v1599 = vmul.f32 %v1402, %v1592
        %v1600 = vmul.f32 %v1559, %v1592
        %v1601 = vmul.f32 %v1405, %v1592
        %v1602 = vmul.f32 %v1560, %v1592
        %v1603 = vmul.f32 %v1408, %v1592
        %v1604 = vmul.f32 %v1561, %v1592
        %v1605 = vmul.f32 %v1411, %v1592
        %v1606 = vmul.f32 %v1562, %v1592
        %v1607 = vmul.f32 %v1414, %v1592
        %v1608 = vmul.f32 %v1563, %v1592
        %v1609 = vmul.f32 %v1417, %v1592
        %v1610 = vmul.f32 %v1564, %v1592
        %v1611 = vmul.f32 %v1420, %v1592
        %v1612 = vmul.f32 %v1565, %v1592
        %v1613 = vmul.f32 %v1423, %v1592
        %v1614 = vmul.f32 %v1566, %v1592
        %v1615 = vmul.f32 %v1426, %v1592
        %v1616 = vmul.f32 %v1567, %v1592
        %v1617 = vmul.f32 %v1429, %v1592
        %v1618 = vmul.f32 %v1568, %v1592
        %v1619 = vmul.f32 %v1432, %v1592
        %v1620 = vmul.f32 %v1569, %v1592
        %v1621 = vmul.f32 %v1435, %v1592
        %v1622 = vmul.f32 %v1570, %v1592
        %v1623 = vmul.f32 %v1438, %v1592
        %v1624 = vmul.f32 %v1571, %v1592
        %v1625 = vmul.f32 %v1444, %v1592
        %v1626 = vmul.f32 %v1573, %v1592
        %v1627 = vmul.f32 %v1447, %v1592
        %v1628 = vmul.f32 %v1574, %v1592
        %v1629 = vmul.f32 %v1450, %v1592
        %v1630 = vmul.f32 %v1575, %v1592
        %v1631 = vmul.f32 %v1453, %v1592
        %v1632 = vmul.f32 %v1576, %v1592
        %v1633 = vmul.f32 %v1456, %v1592
        %v1634 = vmul.f32 %v1577, %v1592
        %v1635 = vmul.f32 %v1459, %v1592
        %v1636 = vmul.f32 %v1578, %v1592
        %v1637 = vmul.f32 %v1462, %v1592
        %v1638 = vmul.f32 %v1579, %v1592
        %v1639 = vmul.f32 %v1465, %v1592
        %v1640 = vmul.f32 %v1580, %v1592
        %v1641 = vmul.f32 %v1468, %v1592
        %v1642 = vmul.f32 %v1581, %v1592
        %v1643 = vmul.f32 %v1471, %v1592
        %v1644 = vmul.f32 %v1582, %v1592
        %v1645 = vmul.f32 %v1474, %v1592
        %v1646 = vmul.f32 %v1583, %v1592
        %v1647 = vmul.f32 %v1477, %v1592
        %v1648 = vmul.f32 %v1584, %v1592
        %v1649 = vmul.f32 %v1480, %v1592
        %v1650 = vmul.f32 %v1585, %v1592
        %v1651 = vmul.f32 %v1483, %v1592
        %v1652 = vmul.f32 %v1586, %v1592
        %v1653 = vmul.f32 %v1486, %v1592
        %v1654 = vmul.f32 %v1587, %v1592
        %v1655 = vadd.f32 %v1327, %v1593
        %v1656 = vadd.f32 %v1328, %v1594
        %v1657 = vadd.f32 %v1329, %v1595
        %v1658 = vadd.f32 %v1330, %v1596
        %v1659 = vadd.f32 %v1331, %v1597
        %v1660 = vadd.f32 %v1332, %v1598
        %v1661 = vadd.f32 %v1333, %v1599
        %v1662 = vadd.f32 %v1334, %v1600
        %v1663 = vadd.f32 %v1335, %v1601
        %v1664 = vadd.f32 %v1336, %v1602
        %v1665 = vadd.f32 %v1337, %v1603
        %v1666 = vadd.f32 %v1338, %v1604
        %v1667 = vadd.f32 %v1339, %v1605
        %v1668 = vadd.f32 %v1340, %v1606
        %v1669 = vadd.f32 %v1341, %v1607
        %v1670 = vadd.f32 %v1342, %v1608
        %v1671 = vadd.f32 %v1343, %v1609
        %v1672 = vadd.f32 %v1344, %v1610
        %v1673 = vadd.f32 %v1345, %v1611
        %v1674 = vadd.f32 %v1346, %v1612
        %v1675 = vadd.f32 %v1347, %v1613
        %v1676 = vadd.f32 %v1348, %v1614
        %v1677 = vadd.f32 %v1349, %v1615
        %v1678 = vadd.f32 %v1350, %v1616
        %v1679 = vadd.f32 %v1351, %v1617
        %v1680 = vadd.f32 %v1352, %v1618
        %v1681 = vadd.f32 %v1353, %v1619
        %v1682 = vadd.f32 %v1354, %v1620
        %v1683 = vadd.f32 %v1355, %v1621
        %v1684 = vadd.f32 %v1356, %v1622
        %v1685 = vadd.f32 %v1357, %v1623
        %v1686 = vadd.f32 %v1358, %v1624
        %v1687 = vadd.f32 %v1359, %v1593
        %v1688 = vadd.f32 %v1360, %v1594
        %v1689 = vadd.f32 %v1361, %v1625
        %v1690 = vadd.f32 %v1362, %v1626
        %v1691 = vadd.f32 %v1363, %v1627
        %v1692 = vadd.f32 %v1364, %v1628
        %v1693 = vadd.f32 %v1365, %v1629
        %v1694 = vadd.f32 %v1366, %v1630
        %v1695 = vadd.f32 %v1367, %v1631
        %v1696 = vadd.f32 %v1368, %v1632
        %v1697 = vadd.f32 %v1369, %v1633
        %v1698 = vadd.f32 %v1370, %v1634
        %v1699 = vadd.f32 %v1371, %v1635
        %v1700 = vadd.f32 %v1372, %v1636
        %v1701 = vadd.f32 %v1373, %v1637
        %v1702 = vadd.f32 %v1374, %v1638
        %v1703 = vadd.f32 %v1375, %v1639
        %v1704 = vadd.f32 %v1376, %v1640
        %v1705 = vadd.f32 %v1377, %v1641
        %v1706 = vadd.f32 %v1378, %v1642
        %v1707 = vadd.f32 %v1379, %v1643
        %v1708 = vadd.f32 %v1380, %v1644
        %v1709 = vadd.f32 %v1381, %v1645
        %v1710 = vadd.f32 %v1382, %v1646
        %v1711 = vadd.f32 %v1383, %v1647
        %v1712 = vadd.f32 %v1384, %v1648
        %v1713 = vadd.f32 %v1385, %v1649
        %v1714 = vadd.f32 %v1386, %v1650
        %v1715 = vadd.f32 %v1387, %v1651
        %v1716 = vadd.f32 %v1388, %v1652
        %v1717 = vadd.f32 %v1389, %v1653
        %v1718 = vadd.f32 %v1390, %v1654
        %v1719 = vlaneseq
        %v1720 = vshrl.u32 %v1719, 7
        %v1721 = vsub.s32 5, %v1720
        %v1722 = vrot.slane %v346, %v1721
        %v1723 = vmul.f32 %v1396, %v1722
        %v1724 = vmul.f32 %v1557, %v1722
        %v1725 = vmul.f32 %v1399, %v1722
        %v1726 = vmul.f32 %v1558, %v1722
        %v1727 = vmul.f32 %v1402, %v1722
        %v1728 = vmul.f32 %v1559, %v1722
        %v1729 = vmul.f32 %v1405, %v1722
        %v1730 = vmul.f32 %v1560, %v1722
        %v1731 = vmul.f32 %v1408, %v1722
        %v1732 = vmul.f32 %v1561, %v1722
        %v1733 = vmul.f32 %v1411, %v1722
        %v1734 = vmul.f32 %v1562, %v1722
        %v1735 = vmul.f32 %v1414, %v1722
        %v1736 = vmul.f32 %v1563, %v1722
        %v1737 = vmul.f32 %v1417, %v1722
        %v1738 = vmul.f32 %v1564, %v1722
        %v1739 = vmul.f32 %v1420, %v1722
        %v1740 = vmul.f32 %v1565, %v1722
        %v1741 = vmul.f32 %v1423, %v1722
        %v1742 = vmul.f32 %v1566, %v1722
        %v1743 = vmul.f32 %v1426, %v1722
        %v1744 = vmul.f32 %v1567, %v1722
        %v1745 = vmul.f32 %v1429, %v1722
        %v1746 = vmul.f32 %v1568, %v1722
        %v1747 = vmul.f32 %v1432, %v1722
        %v1748 = vmul.f32 %v1569, %v1722
        %v1749 = vmul.f32 %v1435, %v1722
        %v1750 = vmul.f32 %v1570, %v1722
        %v1751 = vmul.f32 %v1438, %v1722
        %v1752 = vmul.f32 %v1571, %v1722
        %v1753 = vmul.f32 %v1441, %v1722
        %v1754 = vmul.f32 %v1572, %v1722
        %v1755 = vmul.f32 %v1444, %v1722
        %v1756 = vmul.f32 %v1573, %v1722
        %v1757 = vmul.f32 %v1447, %v1722
        %v1758 = vmul.f32 %v1574, %v1722
        %v1759 = vmul.f32 %v1450, %v1722
        %v1760 = vmul.f32 %v1575, %v1722
        %v1761 = vmul.f32 %v1453, %v1722
        %v1762 = vmul.f32 %v1576, %v1722
        %v1763 = vmul.f32 %v1456, %v1722
        %v1764 = vmul.f32 %v1577, %v1722
        %v1765 = vmul.f32 %v1459, %v1722
        %v1766 = vmul.f32 %v1578, %v1722
        %v1767 = vmul.f32 %v1462, %v1722
        %v1768 = vmul.f32 %v1579, %v1722
        %v1769 = vmul.f32 %v1465, %v1722
        %v1770 = vmul.f32 %v1580, %v1722
        %v1771 = vmul.f32 %v1468, %v1722
        %v1772 = vmul.f32 %v1581, %v1722
        %v1773 = vmul.f32 %v1471, %v1722
        %v1774 = vmul.f32 %v1582, %v1722
        %v1775 = vmul.f32 %v1474, %v1722
        %v1776 = vmul.f32 %v1583, %v1722
        %v1777 = vmul.f32 %v1477, %v1722
        %v1778 = vmul.f32 %v1584, %v1722
        %v1779 = vmul.f32 %v1480, %v1722
        %v1780 = vmul.f32 %v1585, %v1722
        %v1781 = vmul.f32 %v1483, %v1722
        %v1782 = vmul.f32 %v1586, %v1722
        %v1783 = vmul.f32 %v1486, %v1722
        %v1784 = vmul.f32 %v1587, %v1722
        %v1785 = vmul.f32 %v1489, %v1722
        %v1786 = vmul.f32 %v1588, %v1722
        %v1787 = vadd.f32 %v1655, %v1723
        %v1788 = vadd.f32 %v1656, %v1724
        %v1789 = vadd.f32 %v1657, %v1725
        %v1790 = vadd.f32 %v1658, %v1726
        %v1791 = vadd.f32 %v1659, %v1727
        %v1792 = vadd.f32 %v1660, %v1728
        %v1793 = vadd.f32 %v1661, %v1729
        %v1794 = vadd.f32 %v1662, %v1730
        %v1795 = vadd.f32 %v1663, %v1731
        %v1796 = vadd.f32 %v1664, %v1732
        %v1797 = vadd.f32 %v1665, %v1733
        %v1798 = vadd.f32 %v1666, %v1734
        %v1799 = vadd.f32 %v1667, %v1735
        %v1800 = vadd.f32 %v1668, %v1736
        %v1801 = vadd.f32 %v1669, %v1737
        %v1802 = vadd.f32 %v1670, %v1738
        %v1803 = vadd.f32 %v1671, %v1739
        %v1804 = vadd.f32 %v1672, %v1740
        %v1805 = vadd.f32 %v1673, %v1741
        %v1806 = vadd.f32 %v1674, %v1742
        %v1807 = vadd.f32 %v1675, %v1743
        %v1808 = vadd.f32 %v1676, %v1744
        %v1809 = vadd.f32 %v1677, %v1745
        %v1810 = vadd.f32 %v1678, %v1746
        %v1811 = vadd.f32 %v1679, %v1747
        %v1812 = vadd.f32 %v1680, %v1748
        %v1813 = vadd.f32 %v1681, %v1749
        %v1814 = vadd.f32 %v1682, %v1750
        %v1815 = vadd.f32 %v1683, %v1751
        %v1816 = vadd.f32 %v1684, %v1752
        %v1817 = vadd.f32 %v1685, %v1753
        %v1818 = vadd.f32 %v1686, %v1754
        %v1819 = vadd.f32 %v1687, %v1755
        %v1820 = vadd.f32 %v1688, %v1756
        %v1821 = vadd.f32 %v1689, %v1757
        %v1822 = vadd.f32 %v1690, %v1758
        %v1823 = vadd.f32 %v1691, %v1759
        %v1824 = vadd.f32 %v1692, %v1760
        %v1825 = vadd.f32 %v1693, %v1761
        %v1826 = vadd.f32 %v1694, %v1762
        %v1827 = vadd.f32 %v1695, %v1763
        %v1828 = vadd.f32 %v1696, %v1764
        %v1829 = vadd.f32 %v1697, %v1765
        %v1830 = vadd.f32 %v1698, %v1766
        %v1831 = vadd.f32 %v1699, %v1767
        %v1832 = vadd.f32 %v1700, %v1768
        %v1833 = vadd.f32 %v1701, %v1769
        %v1834 = vadd.f32 %v1702, %v1770
        %v1835 = vadd.f32 %v1703, %v1771
        %v1836 = vadd.f32 %v1704, %v1772
        %v1837 = vadd.f32 %v1705, %v1773
        %v1838 = vadd.f32 %v1706, %v1774
        %v1839 = vadd.f32 %v1707, %v1775
        %v1840 = vadd.f32 %v1708, %v1776
        %v1841 = vadd.f32 %v1709, %v1777
        %v1842 = vadd.f32 %v1710, %v1778
        %v1843 = vadd.f32 %v1711, %v1779
        %v1844 = vadd.f32 %v1712, %v1780
        %v1845 = vadd.f32 %v1713, %v1781
        %v1846 = vadd.f32 %v1714, %v1782
        %v1847 = vadd.f32 %v1715, %v1783
        %v1848 = vadd.f32 %v1716, %v1784
        %v1849 = vadd.f32 %v1717, %v1785
        %v1850 = vadd.f32 %v1718, %v1786
        %v1851 = vlaneseq
        %v1852 = vshrl.u32 %v1851, 7
        %v1853 = vsub.s32 0, %v1852
        %v1854 = vrot.slane %v347, %v1853
        %v1855 = vmul.f32 %v1399, %v1854
        %v1856 = vmul.f32 %v1558, %v1854
        %v1857 = vmul.f32 %v1402, %v1854
        %v1858 = vmul.f32 %v1559, %v1854
        %v1859 = vmul.f32 %v1405, %v1854
        %v1860 = vmul.f32 %v1560, %v1854
        %v1861 = vmul.f32 %v1408, %v1854
        %v1862 = vmul.f32 %v1561, %v1854
        %v1863 = vmul.f32 %v1411, %v1854
        %v1864 = vmul.f32 %v1562, %v1854
        %v1865 = vmul.f32 %v1414, %v1854
        %v1866 = vmul.f32 %v1563, %v1854
        %v1867 = vmul.f32 %v1417, %v1854
        %v1868 = vmul.f32 %v1564, %v1854
        %v1869 = vmul.f32 %v1420, %v1854
        %v1870 = vmul.f32 %v1565, %v1854
        %v1871 = vmul.f32 %v1423, %v1854
        %v1872 = vmul.f32 %v1566, %v1854
        %v1873 = vmul.f32 %v1426, %v1854
        %v1874 = vmul.f32 %v1567, %v1854
        %v1875 = vmul.f32 %v1429, %v1854
        %v1876 = vmul.f32 %v1568, %v1854
        %v1877 = vmul.f32 %v1432, %v1854
        %v1878 = vmul.f32 %v1569, %v1854
        %v1879 = vmul.f32 %v1435, %v1854
        %v1880 = vmul.f32 %v1570, %v1854
        %v1881 = vmul.f32 %v1438, %v1854
        %v1882 = vmul.f32 %v1571, %v1854
        %v1883 = vmul.f32 %v1441, %v1854
        %v1884 = vmul.f32 %v1572, %v1854
        %v1885 = vmul.f32 %v1393, %v1854
        %v1886 = vmul.f32 %v1556, %v1854
        %v1887 = vmul.f32 %v1447, %v1854
        %v1888 = vmul.f32 %v1574, %v1854
        %v1889 = vmul.f32 %v1450, %v1854
        %v1890 = vmul.f32 %v1575, %v1854
        %v1891 = vmul.f32 %v1453, %v1854
        %v1892 = vmul.f32 %v1576, %v1854
        %v1893 = vmul.f32 %v1456, %v1854
        %v1894 = vmul.f32 %v1577, %v1854
        %v1895 = vmul.f32 %v1459, %v1854
        %v1896 = vmul.f32 %v1578, %v1854
        %v1897 = vmul.f32 %v1462, %v1854
        %v1898 = vmul.f32 %v1579, %v1854
        %v1899 = vmul.f32 %v1465, %v1854
        %v1900 = vmul.f32 %v1580, %v1854
        %v1901 = vmul.f32 %v1468, %v1854
        %v1902 = vmul.f32 %v1581, %v1854
        %v1903 = vmul.f32 %v1471, %v1854
        %v1904 = vmul.f32 %v1582, %v1854
        %v1905 = vmul.f32 %v1474, %v1854
        %v1906 = vmul.f32 %v1583, %v1854
        %v1907 = vmul.f32 %v1477, %v1854
        %v1908 = vmul.f32 %v1584, %v1854
        %v1909 = vmul.f32 %v1480, %v1854
        %v1910 = vmul.f32 %v1585, %v1854
        %v1911 = vmul.f32 %v1483, %v1854
        %v1912 = vmul.f32 %v1586, %v1854
        %v1913 = vmul.f32 %v1486, %v1854
        %v1914 = vmul.f32 %v1587, %v1854
        %v1915 = vmul.f32 %v1489, %v1854
        %v1916 = vmul.f32 %v1588, %v1854
        %v1917 = vadd.f32 %v1787, %v1855
        %v1918 = vadd.f32 %v1788, %v1856
        %v1919 = vadd.f32 %v1789, %v1857
        %v1920 = vadd.f32 %v1790, %v1858
        %v1921 = vadd.f32 %v1791, %v1859
        %v1922 = vadd.f32 %v1792, %v1860
        %v1923 = vadd.f32 %v1793, %v1861
        %v1924 = vadd.f32 %v1794, %v1862
        %v1925 = vadd.f32 %v1795, %v1863
        %v1926 = vadd.f32 %v1796, %v1864
        %v1927 = vadd.f32 %v1797, %v1865
        %v1928 = vadd.f32 %v1798, %v1866
        %v1929 = vadd.f32 %v1799, %v1867
        %v1930 = vadd.f32 %v1800, %v1868
        %v1931 = vadd.f32 %v1801, %v1869
        %v1932 = vadd.f32 %v1802, %v1870
        %v1933 = vadd.f32 %v1803, %v1871
        %v1934 = vadd.f32 %v1804, %v1872
        %v1935 = vadd.f32 %v1805, %v1873
        %v1936 = vadd.f32 %v1806, %v1874
        %v1937 = vadd.f32 %v1807, %v1875
        %v1938 = vadd.f32 %v1808, %v1876
        %v1939 = vadd.f32 %v1809, %v1877
        %v1940 = vadd.f32 %v1810, %v1878
        %v1941 = vadd.f32 %v1811, %v1879
        %v1942 = vadd.f32 %v1812, %v1880
        %v1943 = vadd.f32 %v1813, %v1881
        %v1944 = vadd.f32 %v1814, %v1882
        %v1945 = vadd.f32 %v1815, %v1883
        %v1946 = vadd.f32 %v1816, %v1884
        %v1947 = vadd.f32 %v1817, %v1885
        %v1948 = vadd.f32 %v1818, %v1886
        %v1949 = vadd.f32 %v1819, %v1887
        %v1950 = vadd.f32 %v1820, %v1888
        %v1951 = vadd.f32 %v1821, %v1889
        %v1952 = vadd.f32 %v1822, %v1890
        %v1953 = vadd.f32 %v1823, %v1891
        %v1954 = vadd.f32 %v1824, %v1892
        %v1955 = vadd.f32 %v1825, %v1893
        %v1956 = vadd.f32 %v1826, %v1894
        %v1957 = vadd.f32 %v1827, %v1895
        %v1958 = vadd.f32 %v1828, %v1896
        %v1959 = vadd.f32 %v1829, %v1897
        %v1960 = vadd.f32 %v1830, %v1898
        %v1961 = vadd.f32 %v1831, %v1899
        %v1962 = vadd.f32 %v1832, %v1900
        %v1963 = vadd.f32 %v1833, %v1901
        %v1964 = vadd.f32 %v1834, %v1902
        %v1965 = vadd.f32 %v1835, %v1903
        %v1966 = vadd.f32 %v1836, %v1904
        %v1967 = vadd.f32 %v1837, %v1905
        %v1968 = vadd.f32 %v1838, %v1906
        %v1969 = vadd.f32 %v1839, %v1907
        %v1970 = vadd.f32 %v1840, %v1908
        %v1971 = vadd.f32 %v1841, %v1909
        %v1972 = vadd.f32 %v1842, %v1910
        %v1973 = vadd.f32 %v1843, %v1911
        %v1974 = vadd.f32 %v1844, %v1912
        %v1975 = vadd.f32 %v1845, %v1913
        %v1976 = vadd.f32 %v1846, %v1914
        %v1977 = vadd.f32 %v1847, %v1915
        %v1978 = vadd.f32 %v1848, %v1916
        %v1979 = vadd.f32 %v1849, %v1885
        %v1980 = vadd.f32 %v1850, %v1886
        %v1981 = vadd.f32 %v1917, %v1918
        %v1982 = vadd.f32 %v1981, %v1919
        %v1983 = vadd.f32 %v1982, %v1920
        %v1984 = vadd.f32 %v1983, %v1921
        %v1985 = vadd.f32 %v1984, %v1922
        %v1986 = vadd.f32 %v1985, %v1923
        %v1987 = vadd.f32 %v1986, %v1924
        %v1988 = vadd.f32 %v1987, %v1925
        %v1989 = vadd.f32 %v1988, %v1926
        %v1990 = vadd.f32 %v1989, %v1927
        %v1991 = vadd.f32 %v1990, %v1928
        %v1992 = vadd.f32 %v1991, %v1929
        %v1993 = vadd.f32 %v1992, %v1930
        %v1994 = vadd.f32 %v1993, %v1931
        %v1995 = vadd.f32 %v1994, %v1932
        %v1996 = vadd.f32 %v1995, %v1933
        %v1997 = vadd.f32 %v1996, %v1934
        %v1998 = vadd.f32 %v1997, %v1935
        %v1999 = vadd.f32 %v1998, %v1936
        %v2000 = vadd.f32 %v1999, %v1937
        %v2001 = vadd.f32 %v2000, %v1938
        %v2002 = vadd.f32 %v2001, %v1939
        %v2003 = vadd.f32 %v2002, %v1940
        %v2004 = vadd.f32 %v2003, %v1941
        %v2005 = vadd.f32 %v2004, %v1942
        %v2006 = vadd.f32 %v2005, %v1943
        %v2007 = vadd.f32 %v2006, %v1944
        %v2008 = vadd.f32 %v2007, %v1945
        %v2009 = vadd.f32 %v2008, %v1946
        %v2010 = vadd.f32 %v2009, %v1947
        %v2011 = vadd.f32 %v2010, %v1948
        %v2012 = vadd.f32 %v2011, %v1949
        %v2013 = vadd.f32 %v2012, %v1950
        %v2014 = vadd.f32 %v2013, %v1951
        %v2015 = vadd.f32 %v2014, %v1952
        %v2016 = vadd.f32 %v2015, %v1953
        %v2017 = vadd.f32 %v2016, %v1954
        %v2018 = vadd.f32 %v2017, %v1955
        %v2019 = vadd.f32 %v2018, %v1956
        %v2020 = vadd.f32 %v2019, %v1957
        %v2021 = vadd.f32 %v2020, %v1958
        %v2022 = vadd.f32 %v2021, %v1959
        %v2023 = vadd.f32 %v2022, %v1960
        %v2024 = vadd.f32 %v2023, %v1961
        %v2025 = vadd.f32 %v2024, %v1962
        %v2026 = vadd.f32 %v2025, %v1963
        %v2027 = vadd.f32 %v2026, %v1964
        %v2028 = vadd.f32 %v2027, %v1965
        %v2029 = vadd.f32 %v2028, %v1966
        %v2030 = vadd.f32 %v2029, %v1967
        %v2031 = vadd.f32 %v2030, %v1968
        %v2032 = vadd.f32 %v2031, %v1969
        %v2033 = vadd.f32 %v2032, %v1970
        %v2034 = vadd.f32 %v2033, %v1971
        %v2035 = vadd.f32 %v2034, %v1972
        %v2036 = vadd.f32 %v2035, %v1973
        %v2037 = vadd.f32 %v2036, %v1974
        %v2038 = vadd.f32 %v2037, %v1975
        %v2039 = vadd.f32 %v2038, %v1976
        %v2040 = vadd.f32 %v2039, %v1977
        %v2041 = vadd.f32 %v2040, %v1978
        %v2042 = vadd.f32 %v2041, %v1979
        %v2043 = vadd.f32 %v2042, %v1980
        %v2044 = vrot.slane %v2043, 4
        %v2045 = vadd.f32 %v2043, %v2044
        %v2046 = vrot.slane %v2045, 2
        %v2047 = vadd.f32 %v2045, %v2046
        %v2048 = vrot.slane %v2047, 1
        %v2049 = vadd.f32 %v2047, %v2048
        %v2050 = vrcp.pop 512.0
        %v2051 = vmul.f32 %v2049, %v2050
        %v2052 = vsub.f32 %v1917, %v2051
        %v2053 = vsub.f32 %v1918, %v2051
        %v2054 = vsub.f32 %v1919, %v2051
        %v2055 = vsub.f32 %v1920, %v2051
        %v2056 = vsub.f32 %v1921, %v2051
        %v2057 = vsub.f32 %v1922, %v2051
        %v2058 = vsub.f32 %v1923, %v2051
        %v2059 = vsub.f32 %v1924, %v2051
        %v2060 = vsub.f32 %v1925, %v2051
        %v2061 = vsub.f32 %v1926, %v2051
        %v2062 = vsub.f32 %v1927, %v2051
        %v2063 = vsub.f32 %v1928, %v2051
        %v2064 = vsub.f32 %v1929, %v2051
        %v2065 = vsub.f32 %v1930, %v2051
        %v2066 = vsub.f32 %v1931, %v2051
        %v2067 = vsub.f32 %v1932, %v2051
        %v2068 = vsub.f32 %v1933, %v2051
        %v2069 = vsub.f32 %v1934, %v2051
        %v2070 = vsub.f32 %v1935, %v2051
        %v2071 = vsub.f32 %v1936, %v2051
        %v2072 = vsub.f32 %v1937, %v2051
        %v2073 = vsub.f32 %v1938, %v2051
        %v2074 = vsub.f32 %v1939, %v2051
        %v2075 = vsub.f32 %v1940, %v2051
        %v2076 = vsub.f32 %v1941, %v2051
        %v2077 = vsub.f32 %v1942, %v2051
        %v2078 = vsub.f32 %v1943, %v2051
        %v2079 = vsub.f32 %v1944, %v2051
        %v2080 = vsub.f32 %v1945, %v2051
        %v2081 = vsub.f32 %v1946, %v2051
        %v2082 = vsub.f32 %v1947, %v2051
        %v2083 = vsub.f32 %v1948, %v2051
        %v2084 = vsub.f32 %v1949, %v2051
        %v2085 = vsub.f32 %v1950, %v2051
        %v2086 = vsub.f32 %v1951, %v2051
        %v2087 = vsub.f32 %v1952, %v2051
        %v2088 = vsub.f32 %v1953, %v2051
        %v2089 = vsub.f32 %v1954, %v2051
        %v2090 = vsub.f32 %v1955, %v2051
        %v2091 = vsub.f32 %v1956, %v2051
        %v2092 = vsub.f32 %v1957, %v2051
        %v2093 = vsub.f32 %v1958, %v2051
        %v2094 = vsub.f32 %v1959, %v2051
        %v2095 = vsub.f32 %v1960, %v2051
        %v2096 = vsub.f32 %v1961, %v2051
        %v2097 = vsub.f32 %v1962, %v2051
        %v2098 = vsub.f32 %v1963, %v2051
        %v2099 = vsub.f32 %v1964, %v2051
        %v2100 = vsub.f32 %v1965, %v2051
        %v2101 = vsub.f32 %v1966, %v2051
        %v2102 = vsub.f32 %v1967, %v2051
        %v2103 = vsub.f32 %v1968, %v2051
        %v2104 = vsub.f32 %v1969, %v2051
        %v2105 = vsub.f32 %v1970, %v2051
        %v2106 = vsub.f32 %v1971, %v2051
        %v2107 = vsub.f32 %v1972, %v2051
        %v2108 = vsub.f32 %v1973, %v2051
        %v2109 = vsub.f32 %v1974, %v2051
        %v2110 = vsub.f32 %v1975, %v2051
        %v2111 = vsub.f32 %v1976, %v2051
        %v2112 = vsub.f32 %v1977, %v2051
        %v2113 = vsub.f32 %v1978, %v2051
        %v2114 = vsub.f32 %v1979, %v2051
        %v2115 = vsub.f32 %v1980, %v2051
        %v2116 = vmul.f32 %v2052, %v2052
        %v2117 = vmul.f32 %v2053, %v2053
        %v2118 = vmul.f32 %v2054, %v2054
        %v2119 = vmul.f32 %v2055, %v2055
        %v2120 = vmul.f32 %v2056, %v2056
        %v2121 = vmul.f32 %v2057, %v2057
        %v2122 = vmul.f32 %v2058, %v2058
        %v2123 = vmul.f32 %v2059, %v2059
        %v2124 = vmul.f32 %v2060, %v2060
        %v2125 = vmul.f32 %v2061, %v2061
        %v2126 = vmul.f32 %v2062, %v2062
        %v2127 = vmul.f32 %v2063, %v2063
        %v2128 = vmul.f32 %v2064, %v2064
        %v2129 = vmul.f32 %v2065, %v2065
        %v2130 = vmul.f32 %v2066, %v2066
        %v2131 = vmul.f32 %v2067, %v2067
        %v2132 = vmul.f32 %v2068, %v2068
        %v2133 = vmul.f32 %v2069, %v2069
        %v2134 = vmul.f32 %v2070, %v2070
        %v2135 = vmul.f32 %v2071, %v2071
        %v2136 = vmul.f32 %v2072, %v2072
        %v2137 = vmul.f32 %v2073, %v2073
        %v2138 = vmul.f32 %v2074, %v2074
        %v2139 = vmul.f32 %v2075, %v2075
        %v2140 = vmul.f32 %v2076, %v2076
        %v2141 = vmul.f32 %v2077, %v2077
        %v2142 = vmul.f32 %v2078, %v2078
        %v2143 = vmul.f32 %v2079, %v2079
        %v2144 = vmul.f32 %v2080, %v2080
        %v2145 = vmul.f32 %v2081, %v2081
        %v2146 = vmul.f32 %v2082, %v2082
        %v2147 = vmul.f32 %v2083, %v2083
        %v2148 = vmul.f32 %v2084, %v2084
        %v2149 = vmul.f32 %v2085, %v2085
        %v2150 = vmul.f32 %v2086, %v2086
        %v2151 = vmul.f32 %v2087, %v2087
        %v2152 = vmul.f32 %v2088, %v2088
        %v2153 = vmul.f32 %v2089, %v2089
        %v2154 = vmul.f32 %v2090, %v2090
        %v2155 = vmul.f32 %v2091, %v2091
        %v2156 = vmul.f32 %v2092, %v2092
        %v2157 = vmul.f32 %v2093, %v2093
        %v2158 = vmul.f32 %v2094, %v2094
        %v2159 = vmul.f32 %v2095, %v2095
        %v2160 = vmul.f32 %v2096, %v2096
        %v2161 = vmul.f32 %v2097, %v2097
        %v2162 = vmul.f32 %v2098, %v2098
        %v2163 = vmul.f32 %v2099, %v2099
        %v2164 = vmul.f32 %v2100, %v2100
        %v2165 = vmul.f32 %v2101, %v2101
        %v2166 = vmul.f32 %v2102, %v2102
        %v2167 = vmul.f32 %v2103, %v2103
        %v2168 = vmul.f32 %v2104, %v2104
        %v2169 = vmul.f32 %v2105, %v2105
        %v2170 = vmul.f32 %v2106, %v2106
        %v2171 = vmul.f32 %v2107, %v2107
        %v2172 = vmul.f32 %v2108, %v2108
        %v2173 = vmul.f32 %v2109, %v2109
        %v2174 = vmul.f32 %v2110, %v2110
        %v2175 = vmul.f32 %v2111, %v2111
        %v2176 = vmul.f32 %v2112, %v2112
        %v2177 = vmul.f32 %v2113, %v2113
        %v2178 = vmul.f32 %v2114, %v2114
        %v2179 = vmul.f32 %v2115, %v2115
        %v2180 = vadd.f32 %v2116, %v2117
        %v2181 = vadd.f32 %v2180, %v2118
        %v2182 = vadd.f32 %v2181, %v2119
        %v2183 = vadd.f32 %v2182, %v2120
        %v2184 = vadd.f32 %v2183, %v2121
        %v2185 = vadd.f32 %v2184, %v2122
        %v2186 = vadd.f32 %v2185, %v2123
        %v2187 = vadd.f32 %v2186, %v2124
        %v2188 = vadd.f32 %v2187, %v2125
        %v2189 = vadd.f32 %v2188, %v2126
        %v2190 = vadd.f32 %v2189, %v2127
        %v2191 = vadd.f32 %v2190, %v2128
        %v2192 = vadd.f32 %v2191, %v2129
        %v2193 = vadd.f32 %v2192, %v2130
        %v2194 = vadd.f32 %v2193, %v2131
        %v2195 = vadd.f32 %v2194, %v2132
        %v2196 = vadd.f32 %v2195, %v2133
        %v2197 = vadd.f32 %v2196, %v2134
        %v2198 = vadd.f32 %v2197, %v2135
        %v2199 = vadd.f32 %v2198, %v2136
        %v2200 = vadd.f32 %v2199, %v2137
        %v2201 = vadd.f32 %v2200, %v2138
        %v2202 = vadd.f32 %v2201, %v2139
        %v2203 = vadd.f32 %v2202, %v2140
        %v2204 = vadd.f32 %v2203, %v2141
        %v2205 = vadd.f32 %v2204, %v2142
        %v2206 = vadd.f32 %v2205, %v2143
        %v2207 = vadd.f32 %v2206, %v2144
        %v2208 = vadd.f32 %v2207, %v2145
        %v2209 = vadd.f32 %v2208, %v2146
        %v2210 = vadd.f32 %v2209, %v2147
        %v2211 = vadd.f32 %v2210, %v2148
        %v2212 = vadd.f32 %v2211, %v2149
        %v2213 = vadd.f32 %v2212, %v2150
        %v2214 = vadd.f32 %v2213, %v2151
        %v2215 = vadd.f32 %v2214, %v2152
        %v2216 = vadd.f32 %v2215, %v2153
        %v2217 = vadd.f32 %v2216, %v2154
        %v2218 = vadd.f32 %v2217, %v2155
        %v2219 = vadd.f32 %v2218, %v2156
        %v2220 = vadd.f32 %v2219, %v2157
        %v2221 = vadd.f32 %v2220, %v2158
        %v2222 = vadd.f32 %v2221, %v2159
        %v2223 = vadd.f32 %v2222, %v2160
        %v2224 = vadd.f32 %v2223, %v2161
        %v2225 = vadd.f32 %v2224, %v2162
        %v2226 = vadd.f32 %v2225, %v2163
        %v2227 = vadd.f32 %v2226, %v2164
        %v2228 = vadd.f32 %v2227, %v2165
        %v2229 = vadd.f32 %v2228, %v2166
        %v2230 = vadd.f32 %v2229, %v2167
        %v2231 = vadd.f32 %v2230, %v2168
        %v2232 = vadd.f32 %v2231, %v2169
        %v2233 = vadd.f32 %v2232, %v2170
        %v2234 = vadd.f32 %v2233, %v2171
        %v2235 = vadd.f32 %v2234, %v2172
        %v2236 = vadd.f32 %v2235, %v2173
        %v2237 = vadd.f32 %v2236, %v2174
        %v2238 = vadd.f32 %v2237, %v2175
        %v2239 = vadd.f32 %v2238, %v2176
        %v2240 = vadd.f32 %v2239, %v2177
        %v2241 = vadd.f32 %v2240, %v2178
        %v2242 = vadd.f32 %v2241, %v2179
        %v2243 = vrot.slane %v2242, 4
        %v2244 = vadd.f32 %v2242, %v2243
        %v2245 = vrot.slane %v2244, 2
        %v2246 = vadd.f32 %v2244, %v2245
        %v2247 = vrot.slane %v2246, 1
        %v2248 = vadd.f32 %v2246, %v2247
        %v2249 = vmul.f32 %v2248, %v2050
        %v2250 = vld [vmem:[%s278] sm:$0x1]
        %v2251 = vld [vmem:[%s281] sm:$0x1]
        %v2252 = vadd.f32 %v2249, 1e-05
        %v2253 = vrsqrt.pop %v2252
        %v2254 = vmul.f32 %v2250, %v2253
        %v2255 = vmul.f32 %v2051, %v2254
        %v2256 = vsub.f32 %v2251, %v2255
        %v2258 = vlaneseq
        %v2259 = vshrl.u32 %v2258, 7
        %v2260 = vsub.s32 0, %v2259
        %v2261 = vrot.slane %v2254, %v2260
        %v2263 = vmul.f32 %v1917, %v2261
        %v2264 = vmul.f32 %v1918, %v2261
        %v2265 = vmul.f32 %v1919, %v2261
        %v2266 = vmul.f32 %v1920, %v2261
        %v2267 = vmul.f32 %v1921, %v2261
        %v2268 = vmul.f32 %v1922, %v2261
        %v2269 = vmul.f32 %v1923, %v2261
        %v2270 = vmul.f32 %v1924, %v2261
        %v2271 = vmul.f32 %v1925, %v2261
        %v2272 = vmul.f32 %v1926, %v2261
        %v2273 = vmul.f32 %v1927, %v2261
        %v2274 = vmul.f32 %v1928, %v2261
        %v2275 = vmul.f32 %v1929, %v2261
        %v2276 = vmul.f32 %v1930, %v2261
        %v2277 = vmul.f32 %v1931, %v2261
        %v2278 = vmul.f32 %v1932, %v2261
        %v2279 = vmul.f32 %v1933, %v2261
        %v2280 = vmul.f32 %v1934, %v2261
        %v2281 = vmul.f32 %v1935, %v2261
        %v2282 = vmul.f32 %v1936, %v2261
        %v2283 = vmul.f32 %v1937, %v2261
        %v2284 = vmul.f32 %v1938, %v2261
        %v2285 = vmul.f32 %v1939, %v2261
        %v2286 = vmul.f32 %v1940, %v2261
        %v2287 = vmul.f32 %v1941, %v2261
        %v2288 = vmul.f32 %v1942, %v2261
        %v2289 = vmul.f32 %v1943, %v2261
        %v2290 = vmul.f32 %v1944, %v2261
        %v2291 = vmul.f32 %v1945, %v2261
        %v2292 = vmul.f32 %v1946, %v2261
        %v2293 = vmul.f32 %v1947, %v2261
        %v2294 = vmul.f32 %v1948, %v2261
        %v2295 = vmul.f32 %v1949, %v2261
        %v2296 = vmul.f32 %v1950, %v2261
        %v2297 = vmul.f32 %v1951, %v2261
        %v2298 = vmul.f32 %v1952, %v2261
        %v2299 = vmul.f32 %v1953, %v2261
        %v2300 = vmul.f32 %v1954, %v2261
        %v2301 = vmul.f32 %v1955, %v2261
        %v2302 = vmul.f32 %v1956, %v2261
        %v2303 = vmul.f32 %v1957, %v2261
        %v2304 = vmul.f32 %v1958, %v2261
        %v2305 = vmul.f32 %v1959, %v2261
        %v2306 = vmul.f32 %v1960, %v2261
        %v2307 = vmul.f32 %v1961, %v2261
        %v2308 = vmul.f32 %v1962, %v2261
        %v2309 = vmul.f32 %v1963, %v2261
        %v2310 = vmul.f32 %v1964, %v2261
        %v2311 = vmul.f32 %v1965, %v2261
        %v2312 = vmul.f32 %v1966, %v2261
        %v2313 = vmul.f32 %v1967, %v2261
        %v2314 = vmul.f32 %v1968, %v2261
        %v2315 = vmul.f32 %v1969, %v2261
        %v2316 = vmul.f32 %v1970, %v2261
        %v2317 = vmul.f32 %v1971, %v2261
        %v2318 = vmul.f32 %v1972, %v2261
        %v2319 = vmul.f32 %v1973, %v2261
        %v2320 = vmul.f32 %v1974, %v2261
        %v2321 = vmul.f32 %v1975, %v2261
        %v2322 = vmul.f32 %v1976, %v2261
        %v2323 = vmul.f32 %v1977, %v2261
        %v2324 = vmul.f32 %v1978, %v2261
        %v2325 = vmul.f32 %v1979, %v2261
        %v2326 = vmul.f32 %v1980, %v2261
        %v2328 = vlaneseq
        %v2329 = vshrl.u32 %v2328, 7
        %v2330 = vsub.s32 0, %v2329
        %v2331 = vrot.slane %v2256, %v2330
        %v2333 = vadd.f32 %v2263, %v2331
        %v2334 = vadd.f32 %v2264, %v2331
        %v2335 = vadd.f32 %v2265, %v2331
        %v2336 = vadd.f32 %v2266, %v2331
        %v2337 = vadd.f32 %v2267, %v2331
        %v2338 = vadd.f32 %v2268, %v2331
        %v2339 = vadd.f32 %v2269, %v2331
        %v2340 = vadd.f32 %v2270, %v2331
        %v2341 = vadd.f32 %v2271, %v2331
        %v2342 = vadd.f32 %v2272, %v2331
        %v2343 = vadd.f32 %v2273, %v2331
        %v2344 = vadd.f32 %v2274, %v2331
        %v2345 = vadd.f32 %v2275, %v2331
        %v2346 = vadd.f32 %v2276, %v2331
        %v2347 = vadd.f32 %v2277, %v2331
        %v2348 = vadd.f32 %v2278, %v2331
        %v2349 = vadd.f32 %v2279, %v2331
        %v2350 = vadd.f32 %v2280, %v2331
        %v2351 = vadd.f32 %v2281, %v2331
        %v2352 = vadd.f32 %v2282, %v2331
        %v2353 = vadd.f32 %v2283, %v2331
        %v2354 = vadd.f32 %v2284, %v2331
        %v2355 = vadd.f32 %v2285, %v2331
        %v2356 = vadd.f32 %v2286, %v2331
        %v2357 = vadd.f32 %v2287, %v2331
        %v2358 = vadd.f32 %v2288, %v2331
        %v2359 = vadd.f32 %v2289, %v2331
        %v2360 = vadd.f32 %v2290, %v2331
        %v2361 = vadd.f32 %v2291, %v2331
        %v2362 = vadd.f32 %v2292, %v2331
        %v2363 = vadd.f32 %v2293, %v2331
        %v2364 = vadd.f32 %v2294, %v2331
        %v2365 = vadd.f32 %v2295, %v2331
        %v2366 = vadd.f32 %v2296, %v2331
        %v2367 = vadd.f32 %v2297, %v2331
        %v2368 = vadd.f32 %v2298, %v2331
        %v2369 = vadd.f32 %v2299, %v2331
        %v2370 = vadd.f32 %v2300, %v2331
        %v2371 = vadd.f32 %v2301, %v2331
        %v2372 = vadd.f32 %v2302, %v2331
        %v2373 = vadd.f32 %v2303, %v2331
        %v2374 = vadd.f32 %v2304, %v2331
        %v2375 = vadd.f32 %v2305, %v2331
        %v2376 = vadd.f32 %v2306, %v2331
        %v2377 = vadd.f32 %v2307, %v2331
        %v2378 = vadd.f32 %v2308, %v2331
        %v2379 = vadd.f32 %v2309, %v2331
        %v2380 = vadd.f32 %v2310, %v2331
        %v2381 = vadd.f32 %v2311, %v2331
        %v2382 = vadd.f32 %v2312, %v2331
        %v2383 = vadd.f32 %v2313, %v2331
        %v2384 = vadd.f32 %v2314, %v2331
        %v2385 = vadd.f32 %v2315, %v2331
        %v2386 = vadd.f32 %v2316, %v2331
        %v2387 = vadd.f32 %v2317, %v2331
        %v2388 = vadd.f32 %v2318, %v2331
        %v2389 = vadd.f32 %v2319, %v2331
        %v2390 = vadd.f32 %v2320, %v2331
        %v2391 = vadd.f32 %v2321, %v2331
        %v2392 = vadd.f32 %v2322, %v2331
        %v2393 = vadd.f32 %v2323, %v2331
        %v2394 = vadd.f32 %v2324, %v2331
        %v2395 = vadd.f32 %v2325, %v2331
        %v2396 = vadd.f32 %v2326, %v2331
        %2397 = vst [vmem:[%s275] sm:$0xff] %v2333
        %2398 = vst [vmem:[%s275 + $0x8] sm:$0xff] %v2334
        %2399 = vst [vmem:[%s275 + $0x10] sm:$0xff] %v2335
        %2400 = vst [vmem:[%s275 + $0x18] sm:$0xff] %v2336
        %2401 = vst [vmem:[%s275 + $0x20] sm:$0xff] %v2337
        %2402 = vst [vmem:[%s275 + $0x28] sm:$0xff] %v2338
        %2403 = vst [vmem:[%s275 + $0x30] sm:$0xff] %v2339
        %2404 = vst [vmem:[%s275 + $0x38] sm:$0xff] %v2340
        %2405 = vst [vmem:[%s275 + $0x40] sm:$0xff] %v2341
        %2406 = vst [vmem:[%s275 + $0x48] sm:$0xff] %v2342
        %2407 = vst [vmem:[%s275 + $0x50] sm:$0xff] %v2343
        %2408 = vst [vmem:[%s275 + $0x58] sm:$0xff] %v2344
        %2409 = vst [vmem:[%s275 + $0x60] sm:$0xff] %v2345
        %2410 = vst [vmem:[%s275 + $0x68] sm:$0xff] %v2346
        %2411 = vst [vmem:[%s275 + $0x70] sm:$0xff] %v2347
        %2412 = vst [vmem:[%s275 + $0x78] sm:$0xff] %v2348
        %2413 = vst [vmem:[%s275 + $0x80] sm:$0xff] %v2349
        %2414 = vst [vmem:[%s275 + $0x88] sm:$0xff] %v2350
        %2415 = vst [vmem:[%s275 + $0x90] sm:$0xff] %v2351
        %2416 = vst [vmem:[%s275 + $0x98] sm:$0xff] %v2352
        %2417 = vst [vmem:[%s275 + $0xa0] sm:$0xff] %v2353
        %2418 = vst [vmem:[%s275 + $0xa8] sm:$0xff] %v2354
        %2419 = vst [vmem:[%s275 + $0xb0] sm:$0xff] %v2355
        %2420 = vst [vmem:[%s275 + $0xb8] sm:$0xff] %v2356
        %2421 = vst [vmem:[%s275 + $0xc0] sm:$0xff] %v2357
        %2422 = vst [vmem:[%s275 + $0xc8] sm:$0xff] %v2358
        %2423 = vst [vmem:[%s275 + $0xd0] sm:$0xff] %v2359
        %2424 = vst [vmem:[%s275 + $0xd8] sm:$0xff] %v2360
        %2425 = vst [vmem:[%s275 + $0xe0] sm:$0xff] %v2361
        %2426 = vst [vmem:[%s275 + $0xe8] sm:$0xff] %v2362
        %2427 = vst [vmem:[%s275 + $0xf0] sm:$0xff] %v2363
        %2428 = vst [vmem:[%s275 + $0xf8] sm:$0xff] %v2364
        %2429 = vst [vmem:[%s275 + $0x100] sm:$0xff] %v2365
        %2430 = vst [vmem:[%s275 + $0x108] sm:$0xff] %v2366
        %2431 = vst [vmem:[%s275 + $0x110] sm:$0xff] %v2367
        %2432 = vst [vmem:[%s275 + $0x118] sm:$0xff] %v2368
        %2433 = vst [vmem:[%s275 + $0x120] sm:$0xff] %v2369
        %2434 = vst [vmem:[%s275 + $0x128] sm:$0xff] %v2370
        %2435 = vst [vmem:[%s275 + $0x130] sm:$0xff] %v2371
        %2436 = vst [vmem:[%s275 + $0x138] sm:$0xff] %v2372
        %2437 = vst [vmem:[%s275 + $0x140] sm:$0xff] %v2373
        %2438 = vst [vmem:[%s275 + $0x148] sm:$0xff] %v2374
        %2439 = vst [vmem:[%s275 + $0x150] sm:$0xff] %v2375
        %2440 = vst [vmem:[%s275 + $0x158] sm:$0xff] %v2376
        %2441 = vst [vmem:[%s275 + $0x160] sm:$0xff] %v2377
        %2442 = vst [vmem:[%s275 + $0x168] sm:$0xff] %v2378
        %2443 = vst [vmem:[%s275 + $0x170] sm:$0xff] %v2379
        %2444 = vst [vmem:[%s275 + $0x178] sm:$0xff] %v2380
        %2445 = vst [vmem:[%s275 + $0x180] sm:$0xff] %v2381
        %2446 = vst [vmem:[%s275 + $0x188] sm:$0xff] %v2382
        %2447 = vst [vmem:[%s275 + $0x190] sm:$0xff] %v2383
        %2448 = vst [vmem:[%s275 + $0x198] sm:$0xff] %v2384
        %2449 = vst [vmem:[%s275 + $0x1a0] sm:$0xff] %v2385
        %2450 = vst [vmem:[%s275 + $0x1a8] sm:$0xff] %v2386
        %2451 = vst [vmem:[%s275 + $0x1b0] sm:$0xff] %v2387
        %2452 = vst [vmem:[%s275 + $0x1b8] sm:$0xff] %v2388
        %2453 = vst [vmem:[%s275 + $0x1c0] sm:$0xff] %v2389
        %2454 = vst [vmem:[%s275 + $0x1c8] sm:$0xff] %v2390
        %2455 = vst [vmem:[%s275 + $0x1d0] sm:$0xff] %v2391
        %2456 = vst [vmem:[%s275 + $0x1d8] sm:$0xff] %v2392
        %2457 = vst [vmem:[%s275 + $0x1e0] sm:$0xff] %v2393
        %2458 = vst [vmem:[%s275 + $0x1e8] sm:$0xff] %v2394
        %2459 = vst [vmem:[%s275 + $0x1f0] sm:$0xff] %v2395
        %2460 = vst [vmem:[%s275 + $0x1f8] sm:$0xff] %v2396
        %s2461 = sand.u32 %s136, 1
        %s2462 = scalar_lea.sflag [#allocation4], %s2461
        %s2463 = sand.u32 %s136, 1
        %s2464 = smul.addr %s2463, 512
        %s2465 = scalar_lea.vmem [#allocation7], %s2464
        // Predicated region
        $region45: #{tpu_custom_call.1} parent=35 // pred_check
          %p2466 = pneg %p146
        $region46: #{tpu_custom_call.1} parent=35 // pred_check_branch
          %2468 = sbr.rel (%p2466) target = $region48
        $region47: #{tpu_custom_call.1} parent=35 // pred_region
          %s2470 = ssub.s32 8192, 8192
          %2471 = vsyncadd %s2462, %s2470
          %s2472 = smul.addr %s24, 128
          %s2473 = scalar_lea.hbm %s4, %s2472
          %s2474 = sshll.u32 %s2465, 4
          %s2475 = int_to_ptr.vmem [resolvable:$true] %s2474
          %2480 = dma.vmem_to_hbm [thread:$0]  %s2475, 8192, %s2473, %s2462, 128, 256, 8
        $region48: #{tpu_custom_call.1} parent=35 // pred_fallthru
          _
      $region36: #{tpu_custom_call.1} parent=5 // pred_fallthru
        _
      %p2481 = scmp.le.s32.totalorder 2, %s19
      // Predicated region
      $region49: #{tpu_custom_call.1} parent=5 // pred_check
        %p2482 = pneg %p2481
      $region50: #{tpu_custom_call.1} parent=5 // pred_check_branch
        %2484 = sbr.rel (%p2482) target = $region52
      $region51: #{tpu_custom_call.1} parent=5 // pred_region
        %s2485 = ssub.s32 %s19, 2
        // Predicated region
        $region53: #{tpu_custom_call.1} parent=51 // pred_check
          %p2486 = pneg %p152
        $region54: #{tpu_custom_call.1} parent=51 // pred_check_branch
          %2488 = sbr.rel (%p2486) target = $region56
        $region55: #{tpu_custom_call.1} parent=51 // pred_region
          %s2489 = sand.u32 %s137, 1
          %s2490 = scalar_lea.sflag [#allocation4], %s2489
          %s2491 = sand.u32 %s137, 1
          %s2492 = smul.addr %s2491, 512
          %s2493 = scalar_lea.vmem [#allocation7], %s2492
          %2494 = dma.done %s2490, 8192
        $region56: #{tpu_custom_call.1} parent=51 // pred_fallthru
          _
      $region52: #{tpu_custom_call.1} parent=5 // pred_fallthru
        _
    $region6: #{tpu_custom_call.1} parent=1 // loop_footer
      %s23 = sadd.s32 1, %s19
    $region7: #{tpu_custom_call.1} parent=1 // loop_footer_branch
      %18 = sbr.rel target = $region3
    $region8: #{tpu_custom_call.1} parent=1 // loop_exit
      _
    %2495 = vsyncpa [#allocation3], 1
    %s2496 = scalar_lea.sflag [#allocation3], 1
    %2497 = vsyncpa %s2496, 1
    %2498 = vsyncpa [#allocation6], 1
    %s2499 = scalar_lea.sflag [#allocation6], 1
    %2500 = vsyncpa %s2499, 1
    %2501 = vsyncpa [#allocation4], 1
    %s2502 = scalar_lea.sflag [#allocation4], 1
    %2503 = vsyncpa %s2502, 1

</llo_original>
